<compile_context>
chip_gen: v7x
topology: tpu7x:2x2x1
jax: 0.10.0
libtpu: 0.0.40
codegen_flags: <defaults>
</compile_context>

<pallas_src>
import functools

import jax
import jax.numpy as jnp
from jax.experimental import pallas as pl
from jax.experimental.pallas import tpu as pltpu


# ----------------------------------------------------------------------------- #
# Pallas kernel: per-batch-row loss reductions + hard negative mining (top-k sum)
# ----------------------------------------------------------------------------- #
def _multibox_loss_kernel(slab_ref, out_ref, lc_ref, *,
                          num_classes, negpos_ratio, num_priors, lane_tile):
    C = num_classes
    _, _, Lp = slab_ref.shape          # slab_ref: (rows, 8, Lp) bf16
    TL = lane_tile
    n_chunks = Lp // TL
    need_mask = (8 * Lp) != num_priors

    def rsum(x):                       # full reduce of a 2-D tile -> (1, 1)
        return jnp.sum(x, keepdims=True)

    def smooth_l1(d):
        ad = jnp.abs(d)
        return jnp.where(ad < 1.0, 0.5 * d * d, ad - 0.5)

    if need_mask:
        sub = jax.lax.broadcasted_iota(jnp.int32, (8, TL), 0)
        lane = jax.lax.broadcasted_iota(jnp.int32, (8, TL), 1)
        base_idx = sub * Lp + lane     # prior index of (sublane, lane) at chunk 0
    else:
        base_idx = None

    # ---- pass 1: chunked over 128-lane tiles (1024 priors each); dense (8, TL) math ----
    def chunk_body(c, carry):
        acc_ll, acc_lm, acc_pce, acc_np, acc_npl = carry
        start = pl.multiple_of(c * TL, TL)
        ds = pl.ds(start, TL)

        ct = slab_ref[28 + C, :, ds].astype(jnp.float32)            # (8, TL) labels
        posf = (ct != 0.0).astype(jnp.float32)                      # box/cls positives
        pos1f = (ct > 0.0).astype(jnp.float32)                      # landmark positives

        # localization smooth-L1 (4 coord planes, masked by pos)
        lp = slab_ref[0:4, :, ds].astype(jnp.float32)               # (4, 8, TL)
        lt = slab_ref[4:8, :, ds].astype(jnp.float32)
        acc_ll = acc_ll + jnp.sum(smooth_l1(lp - lt), axis=0) * posf

        # landmark smooth-L1 (10 planes, masked by pos1)
        mp = slab_ref[8:18, :, ds].astype(jnp.float32)              # (10, 8, TL)
        mt = slab_ref[18:28, :, ds].astype(jnp.float32)
        acc_lm = acc_lm + jnp.sum(smooth_l1(mp - mt), axis=0) * pos1f

        # per-prior cross entropy; positives remapped to class 1 (reference conf_t[pos]=1)
        if C == 2:
            z0 = slab_ref[28, :, ds].astype(jnp.float32)
            z1 = slab_ref[29, :, ds].astype(jnp.float32)
            x = (z1 - z0) * (1.0 - 2.0 * posf)                      # +-(z1 - z0)
            ce = jnp.maximum(x, 0.0) + jnp.log(1.0 + jnp.exp(-jnp.abs(x)))
        else:
            logits = slab_ref[28:28 + C, :, ds].astype(jnp.float32)  # (C, 8, TL)
            row_max = jnp.max(logits, axis=0)
            lse = jnp.log(jnp.sum(jnp.exp(logits - row_max), axis=0)) + row_max
            tgt = jnp.where(posf > 0.0, 1, ct.astype(jnp.int32))
            cls_iota = jax.lax.broadcasted_iota(jnp.int32, (C, 8, TL), 0)
            gathered = jnp.sum(
                logits * (cls_iota == tgt[None]).astype(jnp.float32), axis=0)
            ce = lse - gathered

        acc_pce = acc_pce + ce * posf
        acc_np = acc_np + posf
        acc_npl = acc_npl + pos1f

        negf = 1.0 - posf
        if need_mask:                    # zero lc on padded priors (exact, unmasked vregs)
            validf = ((base_idx + c * TL) < num_priors).astype(jnp.float32)
            negf = negf * validf
        lc_ref[:, ds] = ce * negf        # lc >= 0; zero at positives and padding
        return acc_ll, acc_lm, acc_pce, acc_np, acc_npl

    zero = jnp.zeros((8, TL), jnp.float32)
    acc_ll, acc_lm, acc_pce, acc_np, acc_npl = jax.lax.fori_loop(
        0, n_chunks, chunk_body, (zero, zero, zero, zero, zero))

    loss_l_b = rsum(acc_ll)
    loss_landm_b = rsum(acc_lm)
    pos_ce_sum = rsum(acc_pce)
    num_pos = rsum(acc_np)
    num_pos_landm = rsum(acc_npl)

    # ---- pass 2: exact top-k sum of negative CE over the dense (8, Lp) lc scratch ----
    # lc >= 0, so its f32 bit pattern (int32) is order-preserving; MSB->LSB threshold search
    # finds the k-th largest value, then sum(top-k) = sum(lc > t) + (k - count(lc > t)) * t.
    k = jnp.floor(jnp.minimum(negpos_ratio * num_pos, float(num_priors - 1)))
    k_eff = jnp.maximum(k, 1.0)                                     # guard k == 0
    lc = lc_ref[...]                                                # (8, Lp) f32
    u = pltpu.bitcast(lc, jnp.int32)
    prefix = jnp.zeros((1, 1), jnp.int32)
    for bit in range(30, -1, -1):                                   # sign bit is always 0
        cand = prefix | jnp.int32(1 << bit)
        cnt = rsum(jnp.where(u >= cand, 1.0, 0.0))
        prefix = jnp.where(cnt >= k_eff, cand, prefix)
    gt = u > prefix
    count_gt = rsum(jnp.where(gt, 1.0, 0.0))
    sum_gt = rsum(jnp.where(gt, lc, 0.0))
    kth_val = jnp.max(jnp.where(u == prefix, lc, 0.0), keepdims=True)
    topk_sum = sum_gt + (k - count_gt) * kth_val
    loss_c_b = pos_ce_sum + jnp.where(k >= 1.0, topk_sum, jnp.zeros_like(topk_sum))

    # ---- pack the five per-batch scalars into one lane-dense (8, 128) output block ----
    rid = jax.lax.broadcasted_iota(jnp.int32, (8, 128), 0)
    packed = (jnp.where(rid == 0, loss_l_b, 0.0)
              + jnp.where(rid == 1, loss_c_b, 0.0)
              + jnp.where(rid == 2, loss_landm_b, 0.0)
              + jnp.where(rid == 3, num_pos, 0.0)
              + jnp.where(rid == 4, num_pos_landm, 0.0))
    out_ref[...] = packed


def multibox_loss_pallas(loc_data, conf_data, landm_data, loc_t_fm, conf_t, landm_t_fm,
                         negpos_ratio):
    """loc_data/conf_data/landm_data: (B, P, 4/C/10); loc_t_fm/landm_t_fm: (B, 4/10, P)."""
    B, P, _ = loc_data.shape
    C = conf_data.shape[-1]
    rows = 4 + 4 + 10 + 10 + C + 1

    # Pad the prior axis to a multiple of 1024 (= 8 sublanes * 128 lanes) and lay it out 2-D.
    P_pad = 1024 * ((P + 1023) // 1024)
    Lp = P_pad // 8
    TL = 128
    assert Lp % TL == 0

    # bf16 slab, feature rows stacked on the leading axis, priors dense on (8, Lp).
    slab = jnp.concatenate(
        [jnp.swapaxes(loc_data.astype(jnp.bfloat16), 1, 2),        # (B, 4, P)
         loc_t_fm.astype(jnp.bfloat16),                            # (B, 4, P)
         jnp.swapaxes(landm_data.astype(jnp.bfloat16), 1, 2),      # (B, 10, P)
         landm_t_fm.astype(jnp.bfloat16),                          # (B, 10, P)
         jnp.swapaxes(conf_data.astype(jnp.bfloat16), 1, 2),       # (B, C, P)
         conf_t.reshape(B, 1, P).astype(jnp.bfloat16)],            # (B, 1, P)
        axis=1)                                                    # (B, rows, P)
    slab = jnp.pad(slab, ((0, 0), (0, 0), (0, P_pad - P)))         # neutral zero padding
    slab = slab.reshape(B, rows, 8, Lp)

    in_block_bytes = rows * 8 * Lp * 2
    lc_bytes = 8 * Lp * 4
    vmem_limit = int(max(3 * in_block_bytes + lc_bytes + (4 << 20), 16 << 20))

    grid_spec = pltpu.PrefetchScalarGridSpec(
        num_scalar_prefetch=0,
        grid=(B,),
        in_specs=[pl.BlockSpec((None, rows, 8, Lp), lambda b: (b, 0, 0, 0))],
        out_specs=pl.BlockSpec((None, 8, 128), lambda b: (b, 0, 0)),
        scratch_shapes=[pltpu.VMEM((8, Lp), jnp.float32)],          # dense per-prior lc
    )
    out = pl.pallas_call(
        functools.partial(_multibox_loss_kernel, num_classes=C,
                          negpos_ratio=float(negpos_ratio),
                          num_priors=int(P), lane_tile=TL),
        grid_spec=grid_spec,
        out_shape=jax.ShapeDtypeStruct((B, 8, 128), jnp.float32),
        compiler_params=pltpu.CompilerParams(
            dimension_semantics=("parallel",),      # batch rows split across TCs on v7x
            vmem_limit_bytes=vmem_limit),
    )(slab)

    stats = jnp.sum(out[:, :, 0], axis=0)          # (8,)
    loss_l_sum, loss_c_sum, loss_landm_sum = stats[0], stats[1], stats[2]
    npos, npos_landm = stats[3], stats[4]
    N = jnp.maximum(npos, 1.0)
    N1 = jnp.maximum(npos_landm, 1.0)
    return loss_l_sum / N, loss_c_sum / N, loss_landm_sum / N1


# ----------------------------------------------------------------------------- #
# Plain-JAX glue: RetinaFace prior matching (box_utils.match equivalent), vmapped
# ----------------------------------------------------------------------------- #
def point_form(priors):
    return jnp.concatenate([priors[:, :2] - priors[:, 2:] / 2.0,
                            priors[:, :2] + priors[:, 2:] / 2.0], axis=1)


def jaccard(box_a, box_b):
    max_xy = jnp.minimum(box_a[:, None, 2:], box_b[None, :, 2:])
    min_xy = jnp.maximum(box_a[:, None, :2], box_b[None, :, :2])
    wh = jnp.maximum(max_xy - min_xy, 0.0)
    inter = wh[..., 0] * wh[..., 1]
    area_a = ((box_a[:, 2] - box_a[:, 0]) * (box_a[:, 3] - box_a[:, 1]))[:, None]
    area_b = ((box_b[:, 2] - box_b[:, 0]) * (box_b[:, 3] - box_b[:, 1]))[None, :]
    return inter / (area_a + area_b - inter)


def encode(matched, priors, variances):
    g_cxcy = (matched[:, :2] + matched[:, 2:]) / 2.0 - priors[:, :2]
    g_cxcy = g_cxcy / (variances[0] * priors[:, 2:])
    g_wh = (matched[:, 2:] - matched[:, :2]) / priors[:, 2:]
    g_wh = jnp.log(g_wh) / variances[1]
    return jnp.concatenate([g_cxcy, g_wh], axis=1)


def encode_landm(matched, priors, variances):
    m = matched.reshape(-1, 5, 2)
    g = (m - priors[:, None, :2]) / (variances[0] * priors[:, None, 2:])
    return g.reshape(-1, 10)


def match_single(threshold, truths, priors, variances, labels, landms):
    G = truths.shape[0]
    overlaps = jaccard(truths, point_form(priors))          # (G, P)
    best_prior_overlap = jnp.max(overlaps, axis=1)          # (G,)
    best_prior_idx = jnp.argmax(overlaps, axis=1)           # (G,)
    valid_gt = best_prior_overlap >= 0.2
    has_valid = jnp.any(valid_gt)

    best_truth_overlap = jnp.max(overlaps, axis=0)          # (P,)
    best_truth_idx = jnp.argmax(overlaps, axis=0)           # (P,)
    fill = jnp.where(valid_gt, 2.0, -jnp.inf)
    best_truth_overlap = best_truth_overlap.at[best_prior_idx].max(fill)
    for j in range(G):  # emulate torch's sequential assignment (last write wins)
        best_truth_idx = best_truth_idx.at[best_prior_idx[j]].set(j)

    matches = truths[best_truth_idx]                        # (P, 4)
    conf = labels[best_truth_idx]                           # (P,)
    conf = jnp.where(best_truth_overlap < threshold, 0.0, conf)
    loc = encode(matches, priors, variances)                # (P, 4)
    landm = encode_landm(landms[best_truth_idx], priors, variances)  # (P, 10)

    loc = jnp.where(has_valid, loc, 0.0)
    conf = jnp.where(has_valid, conf, 0.0)
    landm = jnp.where(has_valid, landm, 0.0)
    # feature-major outputs so the Pallas wrapper's slab needs no extra target transpose
    return loc.T, conf.astype(jnp.int32), landm.T


class MultiBoxLoss:
    def __init__(self, num_classes, overlap_thresh, prior_for_matching, bkg_label,
                 neg_mining, neg_pos, neg_overlap, encode_target):
        self.num_classes = num_classes
        self.threshold = overlap_thresh
        self.background_label = bkg_label
        self.encode_target = encode_target
        self.use_prior_for_matching = prior_for_matching
        self.do_neg_mining = neg_mining
        self.negpos_ratio = neg_pos
        self.neg_overlap = neg_overlap
        self.variance = [0.1, 0.2]

    def forward(self, predictions, priors, targets):
        loc_data, conf_data, landm_data = predictions
        targets = jnp.asarray(targets)
        truths = targets[:, :, :4]
        labels = targets[:, :, -1]
        landms = targets[:, :, 4:14]
        match_fn = jax.vmap(lambda t, l, lm: match_single(
            self.threshold, t, priors, self.variance, l, lm))
        loc_t_fm, conf_t, landm_t_fm = match_fn(truths, labels, landms)
        return multibox_loss_pallas(loc_data, conf_data, landm_data,
                                    loc_t_fm, conf_t, landm_t_fm, self.negpos_ratio)


# ----------------------------------------------------------------------------- #
# Pure-JAX reference (mirrors the torch code with a sort-based rank) for checking
# ----------------------------------------------------------------------------- #
def _reference_loss(loc_data, conf_data, landm_data, loc_t, conf_t, landm_t, negpos_ratio):
    B, P, C = conf_data.shape

    def smooth_l1(d):
        ad = jnp.abs(d)
        return jnp.where(ad < 1.0, 0.5 * d * d, ad - 0.5)

    pos1 = conf_t > 0
    pos = conf_t != 0
    loss_landm = jnp.sum(smooth_l1(landm_data - landm_t) * pos1[..., None])
    loss_l = jnp.sum(smooth_l1(loc_data - loc_t) * pos[..., None])
    conf_t_cl = jnp.where(pos, 1, conf_t)
    lse = jax.scipy.special.logsumexp(conf_data, axis=-1)
    gathered = jnp.take_along_axis(conf_data, conf_t_cl[..., None], axis=-1)[..., 0]
    ce = lse - gathered
    lc = jnp.where(pos, 0.0, ce)
    order = jnp.argsort(-lc, axis=1)
    rank = jnp.argsort(order, axis=1)
    num_pos = jnp.sum(pos, axis=1, keepdims=True)
    num_neg = jnp.minimum(negpos_ratio * num_pos, P - 1)
    neg = rank < num_neg
    loss_c = jnp.sum(jnp.where(pos | neg, ce, 0.0))
    N = jnp.maximum(jnp.sum(num_pos).astype(jnp.float32), 1.0)
    N1 = jnp.maximum(jnp.sum(pos1).astype(jnp.float32), 1.0)
    return loss_l / N, loss_c / N, loss_landm / N1


# ----------------------------------------------------------------------------- #
if __name__ == "__main__":
    B, SIDE, C, G = 2, 8, 2, 3

    # priors (cx, cy, w, h) on an 8x8 grid with two scales -> P = 128
    xs = (jnp.arange(SIDE, dtype=jnp.float32) + 0.5) / SIDE
    cx, cy = jnp.meshgrid(xs, xs, indexing="ij")
    centers = jnp.stack([cx.ravel(), cy.ravel()], axis=-1)          # (64, 2)
    priors = jnp.concatenate([
        jnp.concatenate([centers, jnp.full((SIDE * SIDE, 2), 0.15)], axis=1),
        jnp.concatenate([centers, jnp.full((SIDE * SIDE, 2), 0.35)], axis=1),
    ], axis=0)                                                      # (128, 4)
    P = priors.shape[0]

    key = jax.random.PRNGKey(0)
    k1, k2, k3, k4, k5, k6 = jax.random.split(key, 6)
    loc_data = 0.1 * jax.random.normal(k1, (B, P, 4), jnp.float32)
    conf_data = jax.random.normal(k2, (B, P, C), jnp.float32)
    landm_data = 0.1 * jax.random.normal(k3, (B, P, 10), jnp.float32)

    ctr = jax.random.uniform(k4, (B, G, 2), minval=0.25, maxval=0.75)
    sz = jax.random.uniform(k5, (B, G, 2), minval=0.2, maxval=0.4)
    boxes = jnp.concatenate([ctr - sz / 2.0, ctr + sz / 2.0], axis=-1)   # (B, G, 4)
    landms = jax.random.uniform(k6, (B, G, 10))
    labels = jnp.tile(jnp.array([[1.0, -1.0, 1.0]], jnp.float32), (B, 1))[..., None]
    targets = jnp.concatenate([boxes, landms, labels], axis=-1)          # (B, G, 15)

    criterion = MultiBoxLoss(num_classes=C, overlap_thresh=0.35,
                             prior_for_matching=True, bkg_label=0, neg_mining=True,
                             neg_pos=7, neg_overlap=0.35, encode_target=False)

    loss_l, loss_c, loss_landm = criterion.forward(
        (loc_data, conf_data, landm_data), priors, targets)
    jax.block_until_ready((loss_l, loss_c, loss_landm))

    # correctness check against a pure-JAX torch-equivalent reference.  The Pallas path
    # consumes a bf16 slab, so feed the reference the same bf16-rounded values (accumulation
    # on both sides is f32) for an apples-to-apples comparison.
    match_fn = jax.vmap(lambda t, l, lm: match_single(
        0.35, t, priors, [0.1, 0.2], l, lm))
    loc_t_fm, conf_t_m, landm_t_fm = match_fn(targets[:, :, :4], targets[:, :, -1],
                                              targets[:, :, 4:14])
    q = lambda x: x.astype(jnp.bfloat16).astype(jnp.float32)
    ref = _reference_loss(q(loc_data), q(conf_data), q(landm_data),
                          q(jnp.swapaxes(loc_t_fm, 1, 2)), conf_t_m,
                          q(jnp.swapaxes(landm_t_fm, 1, 2)), 7)
    got = jnp.stack([loss_l, loss_c, loss_landm])
    want = jnp.stack(list(ref))
    if not bool(jnp.allclose(got, want, rtol=2e-3, atol=2e-3)):
        raise AssertionError(f"mismatch: kernel={got} ref={want}")

    print("KERNEL_OK")
</pallas_src>

<mosaic_0001>
module attributes {stable_mosaic.version = 11 : i64} {
  func.func @_multibox_loss_kernel(%arg0: i32, %arg1: memref<1x31x8x128xbf16, #tpu.memory_space<vmem>>, %arg2: memref<1x8x128xf32, #tpu.memory_space<vmem>>, %arg3: memref<8x128xf32, #tpu.memory_space<vmem>>) attributes {dimension_semantics = [#tpu.dimension_semantics<parallel>], iteration_bounds = array<i64: 2>, scalar_prefetch = 0 : i64, scratch_operands = 1 : i64, tpu.core_type = #tpu.core_type<tc>, window_params = [{transform_indices = @transform_0, window_bounds = array<i64: 1, 31, 8, 128>}, {transform_indices = @transform_1, window_bounds = array<i64: 1, 8, 128>}]} {
    %0 = tpu.iota {dimensions = array<i32: 0>} : vector<8x128xi32>
    %1 = tpu.iota {dimensions = array<i32: 1>} : vector<8x128xi32>
    %c128_i32 = arith.constant 128 : i32
    %2 = vector.broadcast %c128_i32 : i32 to vector<8x128xi32>
    %3 = arith.muli %0, %2 : vector<8x128xi32>
    %4 = arith.addi %3, %1 : vector<8x128xi32>
    %cst = arith.constant 0.000000e+00 : f32
    %5 = vector.broadcast %cst : f32 to vector<8x128xf32>
    %c0_i32 = arith.constant 0 : i32
    %c128_i32_0 = arith.constant 128 : i32
    %6 = arith.muli %c0_i32, %c128_i32_0 : i32
    %7 = tpu.assume_multiple %6, 128 : i32
    %c0 = arith.constant 0 : index
    %c30 = arith.constant 30 : index
    %c0_1 = arith.constant 0 : index
    %8 = arith.index_cast %7 : i32 to index
    %9 = vector.load %arg1[%c0, %c30, %c0_1, %8] : memref<1x31x8x128xbf16, #tpu.memory_space<vmem>>, vector<1x1x8x128xbf16>
    %10 = vector.shape_cast %9 : vector<1x1x8x128xbf16> to vector<8x128xbf16>
    %11 = arith.extf %10 : vector<8x128xbf16> to vector<8x128xf32>
    %cst_2 = arith.constant 0.000000e+00 : f32
    %12 = vector.broadcast %cst_2 : f32 to vector<8x128xf32>
    %13 = arith.cmpf one, %11, %12 : vector<8x128xf32>
    %14 = arith.extui %13 : vector<8x128xi1> to vector<8x128xi32>
    %15 = arith.sitofp %14 : vector<8x128xi32> to vector<8x128xf32>
    %cst_3 = arith.constant 0.000000e+00 : f32
    %16 = vector.broadcast %cst_3 : f32 to vector<8x128xf32>
    %17 = arith.cmpf ogt, %11, %16 : vector<8x128xf32>
    %18 = arith.extui %17 : vector<8x128xi1> to vector<8x128xi32>
    %19 = arith.sitofp %18 : vector<8x128xi32> to vector<8x128xf32>
    %c0_4 = arith.constant 0 : index
    %c0_5 = arith.constant 0 : index
    %c0_6 = arith.constant 0 : index
    %20 = arith.index_cast %7 : i32 to index
    %21 = vector.load %arg1[%c0_4, %c0_5, %c0_6, %20] : memref<1x31x8x128xbf16, #tpu.memory_space<vmem>>, vector<1x4x8x128xbf16>
    %22 = vector.shape_cast %21 : vector<1x4x8x128xbf16> to vector<4x8x128xbf16>
    %23 = arith.extf %22 : vector<4x8x128xbf16> to vector<4x8x128xf32>
    %c0_7 = arith.constant 0 : index
    %c4 = arith.constant 4 : index
    %c0_8 = arith.constant 0 : index
    %24 = arith.index_cast %7 : i32 to index
    %25 = vector.load %arg1[%c0_7, %c4, %c0_8, %24] : memref<1x31x8x128xbf16, #tpu.memory_space<vmem>>, vector<1x4x8x128xbf16>
    %26 = vector.shape_cast %25 : vector<1x4x8x128xbf16> to vector<4x8x128xbf16>
    %27 = arith.extf %26 : vector<4x8x128xbf16> to vector<4x8x128xf32>
    %28 = arith.subf %23, %27 : vector<4x8x128xf32>
    %29 = math.absf %28 : vector<4x8x128xf32>
    %cst_9 = arith.constant 1.000000e+00 : f32
    %30 = vector.broadcast %cst_9 : f32 to vector<4x8x128xf32>
    %31 = arith.cmpf olt, %29, %30 : vector<4x8x128xf32>
    %cst_10 = arith.constant 5.000000e-01 : f32
    %32 = vector.broadcast %cst_10 : f32 to vector<4x8x128xf32>
    %33 = arith.mulf %32, %28 : vector<4x8x128xf32>
    %34 = arith.mulf %33, %28 : vector<4x8x128xf32>
    %cst_11 = arith.constant 5.000000e-01 : f32
    %35 = vector.broadcast %cst_11 : f32 to vector<4x8x128xf32>
    %36 = arith.subf %29, %35 : vector<4x8x128xf32>
    %37 = arith.select %31, %34, %36 : vector<4x8x128xi1>, vector<4x8x128xf32>
    %cst_12 = arith.constant dense<0.000000e+00> : vector<8x128xf32>
    %38 = vector.multi_reduction <add>, %37, %cst_12 [0] : vector<4x8x128xf32> to vector<8x128xf32>
    %39 = arith.mulf %38, %15 : vector<8x128xf32>
    %40 = arith.addf %5, %39 : vector<8x128xf32>
    %c0_13 = arith.constant 0 : index
    %c8 = arith.constant 8 : index
    %c0_14 = arith.constant 0 : index
    %41 = arith.index_cast %7 : i32 to index
    %42 = vector.load %arg1[%c0_13, %c8, %c0_14, %41] : memref<1x31x8x128xbf16, #tpu.memory_space<vmem>>, vector<1x10x8x128xbf16>
    %43 = vector.shape_cast %42 : vector<1x10x8x128xbf16> to vector<10x8x128xbf16>
    %44 = arith.extf %43 : vector<10x8x128xbf16> to vector<10x8x128xf32>
    %c0_15 = arith.constant 0 : index
    %c18 = arith.constant 18 : index
    %c0_16 = arith.constant 0 : index
    %45 = arith.index_cast %7 : i32 to index
    %46 = vector.load %arg1[%c0_15, %c18, %c0_16, %45] : memref<1x31x8x128xbf16, #tpu.memory_space<vmem>>, vector<1x10x8x128xbf16>
    %47 = vector.shape_cast %46 : vector<1x10x8x128xbf16> to vector<10x8x128xbf16>
    %48 = arith.extf %47 : vector<10x8x128xbf16> to vector<10x8x128xf32>
    %49 = arith.subf %44, %48 : vector<10x8x128xf32>
    %50 = math.absf %49 : vector<10x8x128xf32>
    %cst_17 = arith.constant 1.000000e+00 : f32
    %51 = vector.broadcast %cst_17 : f32 to vector<10x8x128xf32>
    %52 = arith.cmpf olt, %50, %51 : vector<10x8x128xf32>
    %cst_18 = arith.constant 5.000000e-01 : f32
    %53 = vector.broadcast %cst_18 : f32 to vector<10x8x128xf32>
    %54 = arith.mulf %53, %49 : vector<10x8x128xf32>
    %55 = arith.mulf %54, %49 : vector<10x8x128xf32>
    %cst_19 = arith.constant 5.000000e-01 : f32
    %56 = vector.broadcast %cst_19 : f32 to vector<10x8x128xf32>
    %57 = arith.subf %50, %56 : vector<10x8x128xf32>
    %58 = arith.select %52, %55, %57 : vector<10x8x128xi1>, vector<10x8x128xf32>
    %cst_20 = arith.constant dense<0.000000e+00> : vector<8x128xf32>
    %59 = vector.multi_reduction <add>, %58, %cst_20 [0] : vector<10x8x128xf32> to vector<8x128xf32>
    %60 = arith.mulf %59, %19 : vector<8x128xf32>
    %61 = arith.addf %5, %60 : vector<8x128xf32>
    %c0_21 = arith.constant 0 : index
    %c28 = arith.constant 28 : index
    %c0_22 = arith.constant 0 : index
    %62 = arith.index_cast %7 : i32 to index
    %63 = vector.load %arg1[%c0_21, %c28, %c0_22, %62] : memref<1x31x8x128xbf16, #tpu.memory_space<vmem>>, vector<1x1x8x128xbf16>
    %64 = vector.shape_cast %63 : vector<1x1x8x128xbf16> to vector<8x128xbf16>
    %65 = arith.extf %64 : vector<8x128xbf16> to vector<8x128xf32>
    %c0_23 = arith.constant 0 : index
    %c29 = arith.constant 29 : index
    %c0_24 = arith.constant 0 : index
    %66 = arith.index_cast %7 : i32 to index
    %67 = vector.load %arg1[%c0_23, %c29, %c0_24, %66] : memref<1x31x8x128xbf16, #tpu.memory_space<vmem>>, vector<1x1x8x128xbf16>
    %68 = vector.shape_cast %67 : vector<1x1x8x128xbf16> to vector<8x128xbf16>
    %69 = arith.extf %68 : vector<8x128xbf16> to vector<8x128xf32>
    %70 = arith.subf %69, %65 : vector<8x128xf32>
    %cst_25 = arith.constant 2.000000e+00 : f32
    %71 = vector.broadcast %cst_25 : f32 to vector<8x128xf32>
    %72 = arith.mulf %71, %15 : vector<8x128xf32>
    %cst_26 = arith.constant 1.000000e+00 : f32
    %73 = vector.broadcast %cst_26 : f32 to vector<8x128xf32>
    %74 = arith.subf %73, %72 : vector<8x128xf32>
    %75 = arith.mulf %70, %74 : vector<8x128xf32>
    %cst_27 = arith.constant 0.000000e+00 : f32
    %76 = vector.broadcast %cst_27 : f32 to vector<8x128xf32>
    %77 = arith.maximumf %75, %76 : vector<8x128xf32>
    %78 = math.absf %75 : vector<8x128xf32>
    %cst_28 = arith.constant 0.000000e+00 : f32
    %79 = vector.broadcast %cst_28 : f32 to vector<8x128xf32>
    %80 = arith.subf %79, %78 : vector<8x128xf32>
    %81 = math.exp %80 : vector<8x128xf32>
    %cst_29 = arith.constant 1.000000e+00 : f32
    %82 = vector.broadcast %cst_29 : f32 to vector<8x128xf32>
    %83 = arith.addf %82, %81 : vector<8x128xf32>
    %84 = math.log %83 : vector<8x128xf32>
    %85 = arith.addf %77, %84 : vector<8x128xf32>
    %86 = arith.mulf %85, %15 : vector<8x128xf32>
    %87 = arith.addf %5, %86 : vector<8x128xf32>
    %88 = arith.addf %5, %15 : vector<8x128xf32>
    %89 = arith.addf %5, %19 : vector<8x128xf32>
    %cst_30 = arith.constant 1.000000e+00 : f32
    %90 = vector.broadcast %cst_30 : f32 to vector<8x128xf32>
    %91 = arith.subf %90, %15 : vector<8x128xf32>
    %c128_i32_31 = arith.constant 128 : i32
    %92 = arith.muli %c0_i32, %c128_i32_31 : i32
    %93 = vector.broadcast %92 : i32 to vector<8x128xi32>
    %94 = arith.addi %4, %93 : vector<8x128xi32>
    %c128_i32_32 = arith.constant 128 : i32
    %95 = vector.broadcast %c128_i32_32 : i32 to vector<8x128xi32>
    %96 = arith.cmpi slt, %94, %95 : vector<8x128xi32>
    %97 = arith.extui %96 : vector<8x128xi1> to vector<8x128xi32>
    %98 = arith.sitofp %97 : vector<8x128xi32> to vector<8x128xf32>
    %99 = arith.mulf %91, %98 : vector<8x128xf32>
    %100 = arith.mulf %85, %99 : vector<8x128xf32>
    %c0_33 = arith.constant 0 : index
    %101 = arith.index_cast %7 : i32 to index
    %102 = vector.load %arg3[%c0_33, %101] : memref<8x128xf32, #tpu.memory_space<vmem>>, vector<8x128xf32>
    tpu.vector_store %arg3[%c0_33, %101], %100 {strides = array<i32>} : memref<8x128xf32, #tpu.memory_space<vmem>>, vector<8x128xf32>,
    %c1_i32 = arith.constant 1 : i32
    %103 = vector.shape_cast %40 : vector<8x128xf32> to vector<1x8x128xf32>
    %cst_34 = arith.constant dense<0.000000e+00> : vector<1xf32>
    %104 = vector.multi_reduction <add>, %103, %cst_34 [1, 2] : vector<1x8x128xf32> to vector<1xf32>
    %105 = vector.shape_cast %104 : vector<1xf32> to vector<1x1x1xf32>
    %106 = vector.extract %105[0, 0, 0] : f32 from vector<1x1x1xf32>
    %107 = vector.broadcast %106 : f32 to vector<1x1xf32>
    %108 = vector.shape_cast %61 : vector<8x128xf32> to vector<1x8x128xf32>
    %cst_35 = arith.constant dense<0.000000e+00> : vector<1xf32>
    %109 = vector.multi_reduction <add>, %108, %cst_35 [1, 2] : vector<1x8x128xf32> to vector<1xf32>
    %110 = vector.shape_cast %109 : vector<1xf32> to vector<1x1x1xf32>
    %111 = vector.extract %110[0, 0, 0] : f32 from vector<1x1x1xf32>
    %112 = vector.broadcast %111 : f32 to vector<1x1xf32>
    %113 = vector.shape_cast %87 : vector<8x128xf32> to vector<1x8x128xf32>
    %cst_36 = arith.constant dense<0.000000e+00> : vector<1xf32>
    %114 = vector.multi_reduction <add>, %113, %cst_36 [1, 2] : vector<1x8x128xf32> to vector<1xf32>
    %115 = vector.shape_cast %114 : vector<1xf32> to vector<1x1x1xf32>
    %116 = vector.extract %115[0, 0, 0] : f32 from vector<1x1x1xf32>
    %117 = vector.broadcast %116 : f32 to vector<1x1xf32>
    %118 = vector.shape_cast %88 : vector<8x128xf32> to vector<1x8x128xf32>
    %cst_37 = arith.constant dense<0.000000e+00> : vector<1xf32>
    %119 = vector.multi_reduction <add>, %118, %cst_37 [1, 2] : vector<1x8x128xf32> to vector<1xf32>
    %120 = vector.shape_cast %119 : vector<1xf32> to vector<1x1x1xf32>
    %121 = vector.extract %120[0, 0, 0] : f32 from vector<1x1x1xf32>
    %122 = vector.broadcast %121 : f32 to vector<1x1xf32>
    %123 = vector.shape_cast %89 : vector<8x128xf32> to vector<1x8x128xf32>
    %cst_38 = arith.constant dense<0.000000e+00> : vector<1xf32>
    %124 = vector.multi_reduction <add>, %123, %cst_38 [1, 2] : vector<1x8x128xf32> to vector<1xf32>
    %125 = vector.shape_cast %124 : vector<1xf32> to vector<1x1x1xf32>
    %126 = vector.extract %125[0, 0, 0] : f32 from vector<1x1x1xf32>
    %127 = vector.broadcast %126 : f32 to vector<1x1xf32>
    %cst_39 = arith.constant 7.000000e+00 : f32
    %128 = vector.broadcast %cst_39 : f32 to vector<1x1xf32>
    %129 = arith.mulf %128, %122 : vector<1x1xf32>
    %cst_40 = arith.constant 1.270000e+02 : f32
    %130 = vector.broadcast %cst_40 : f32 to vector<1x1xf32>
    %131 = arith.minimumf %129, %130 : vector<1x1xf32>
    %132 = math.floor %131 : vector<1x1xf32>
    %cst_41 = arith.constant 1.000000e+00 : f32
    %133 = vector.broadcast %cst_41 : f32 to vector<1x1xf32>
    %134 = arith.maximumf %132, %133 : vector<1x1xf32>
    %c0_42 = arith.constant 0 : index
    %c0_43 = arith.constant 0 : index
    %135 = vector.load %arg3[%c0_42, %c0_43] : memref<8x128xf32, #tpu.memory_space<vmem>>, vector<8x128xf32>
    %136 = tpu.bitcast %135 : vector<8x128xf32> -> vector<8x128xi32>
    %c0_i32_44 = arith.constant 0 : i32
    %137 = vector.broadcast %c0_i32_44 : i32 to vector<1x1xi32>
    %c1073741824_i32 = arith.constant 1073741824 : i32
    %138 = vector.broadcast %c1073741824_i32 : i32 to vector<1x1xi32>
    %139 = arith.ori %137, %138 : vector<1x1xi32>
    %140 = vector.broadcast %139 : vector<1x1xi32> to vector<8x128xi32>
    %141 = arith.cmpi sge, %136, %140 : vector<8x128xi32>
    %cst_45 = arith.constant 1.000000e+00 : f32
    %cst_46 = arith.constant 0.000000e+00 : f32
    %142 = vector.broadcast %cst_45 : f32 to vector<8x128xf32>
    %143 = vector.broadcast %cst_46 : f32 to vector<8x128xf32>
    %144 = arith.select %141, %142, %143 : vector<8x128xi1>, vector<8x128xf32>
    %145 = vector.shape_cast %144 : vector<8x128xf32> to vector<1x8x128xf32>
    %cst_47 = arith.constant dense<0.000000e+00> : vector<1xf32>
    %146 = vector.multi_reduction <add>, %145, %cst_47 [1, 2] : vector<1x8x128xf32> to vector<1xf32>
    %147 = vector.shape_cast %146 : vector<1xf32> to vector<1x1x1xf32>
    %148 = vector.extract %147[0, 0, 0] : f32 from vector<1x1x1xf32>
    %149 = vector.broadcast %148 : f32 to vector<1x1xf32>
    %150 = arith.cmpf oge, %149, %134 : vector<1x1xf32>
    %151 = arith.select %150, %139, %137 : vector<1x1xi1>, vector<1x1xi32>
    %c536870912_i32 = arith.constant 536870912 : i32
    %152 = vector.broadcast %c536870912_i32 : i32 to vector<1x1xi32>
    %153 = arith.ori %151, %152 : vector<1x1xi32>
    %154 = vector.broadcast %153 : vector<1x1xi32> to vector<8x128xi32>
    %155 = arith.cmpi sge, %136, %154 : vector<8x128xi32>
    %cst_48 = arith.constant 1.000000e+00 : f32
    %cst_49 = arith.constant 0.000000e+00 : f32
    %156 = vector.broadcast %cst_48 : f32 to vector<8x128xf32>
    %157 = vector.broadcast %cst_49 : f32 to vector<8x128xf32>
    %158 = arith.select %155, %156, %157 : vector<8x128xi1>, vector<8x128xf32>
    %159 = vector.shape_cast %158 : vector<8x128xf32> to vector<1x8x128xf32>
    %cst_50 = arith.constant dense<0.000000e+00> : vector<1xf32>
    %160 = vector.multi_reduction <add>, %159, %cst_50 [1, 2] : vector<1x8x128xf32> to vector<1xf32>
    %161 = vector.shape_cast %160 : vector<1xf32> to vector<1x1x1xf32>
    %162 = vector.extract %161[0, 0, 0] : f32 from vector<1x1x1xf32>
    %163 = vector.broadcast %162 : f32 to vector<1x1xf32>
    %164 = arith.cmpf oge, %163, %134 : vector<1x1xf32>
    %165 = arith.select %164, %153, %151 : vector<1x1xi1>, vector<1x1xi32>
    %c268435456_i32 = arith.constant 268435456 : i32
    %166 = vector.broadcast %c268435456_i32 : i32 to vector<1x1xi32>
    %167 = arith.ori %165, %166 : vector<1x1xi32>
    %168 = vector.broadcast %167 : vector<1x1xi32> to vector<8x128xi32>
    %169 = arith.cmpi sge, %136, %168 : vector<8x128xi32>
    %cst_51 = arith.constant 1.000000e+00 : f32
    %cst_52 = arith.constant 0.000000e+00 : f32
    %170 = vector.broadcast %cst_51 : f32 to vector<8x128xf32>
    %171 = vector.broadcast %cst_52 : f32 to vector<8x128xf32>
    %172 = arith.select %169, %170, %171 : vector<8x128xi1>, vector<8x128xf32>
    %173 = vector.shape_cast %172 : vector<8x128xf32> to vector<1x8x128xf32>
    %cst_53 = arith.constant dense<0.000000e+00> : vector<1xf32>
    %174 = vector.multi_reduction <add>, %173, %cst_53 [1, 2] : vector<1x8x128xf32> to vector<1xf32>
    %175 = vector.shape_cast %174 : vector<1xf32> to vector<1x1x1xf32>
    %176 = vector.extract %175[0, 0, 0] : f32 from vector<1x1x1xf32>
    %177 = vector.broadcast %176 : f32 to vector<1x1xf32>
    %178 = arith.cmpf oge, %177, %134 : vector<1x1xf32>
    %179 = arith.select %178, %167, %165 : vector<1x1xi1>, vector<1x1xi32>
    %c134217728_i32 = arith.constant 134217728 : i32
    %180 = vector.broadcast %c134217728_i32 : i32 to vector<1x1xi32>
    %181 = arith.ori %179, %180 : vector<1x1xi32>
    %182 = vector.broadcast %181 : vector<1x1xi32> to vector<8x128xi32>
    %183 = arith.cmpi sge, %136, %182 : vector<8x128xi32>
    %cst_54 = arith.constant 1.000000e+00 : f32
    %cst_55 = arith.constant 0.000000e+00 : f32
    %184 = vector.broadcast %cst_54 : f32 to vector<8x128xf32>
    %185 = vector.broadcast %cst_55 : f32 to vector<8x128xf32>
    %186 = arith.select %183, %184, %185 : vector<8x128xi1>, vector<8x128xf32>
    %187 = vector.shape_cast %186 : vector<8x128xf32> to vector<1x8x128xf32>
    %cst_56 = arith.constant dense<0.000000e+00> : vector<1xf32>
    %188 = vector.multi_reduction <add>, %187, %cst_56 [1, 2] : vector<1x8x128xf32> to vector<1xf32>
    %189 = vector.shape_cast %188 : vector<1xf32> to vector<1x1x1xf32>
    %190 = vector.extract %189[0, 0, 0] : f32 from vector<1x1x1xf32>
    %191 = vector.broadcast %190 : f32 to vector<1x1xf32>
    %192 = arith.cmpf oge, %191, %134 : vector<1x1xf32>
    %193 = arith.select %192, %181, %179 : vector<1x1xi1>, vector<1x1xi32>
    %c67108864_i32 = arith.constant 67108864 : i32
    %194 = vector.broadcast %c67108864_i32 : i32 to vector<1x1xi32>
    %195 = arith.ori %193, %194 : vector<1x1xi32>
    %196 = vector.broadcast %195 : vector<1x1xi32> to vector<8x128xi32>
    %197 = arith.cmpi sge, %136, %196 : vector<8x128xi32>
    %cst_57 = arith.constant 1.000000e+00 : f32
    %cst_58 = arith.constant 0.000000e+00 : f32
    %198 = vector.broadcast %cst_57 : f32 to vector<8x128xf32>
    %199 = vector.broadcast %cst_58 : f32 to vector<8x128xf32>
    %200 = arith.select %197, %198, %199 : vector<8x128xi1>, vector<8x128xf32>
    %201 = vector.shape_cast %200 : vector<8x128xf32> to vector<1x8x128xf32>
    %cst_59 = arith.constant dense<0.000000e+00> : vector<1xf32>
    %202 = vector.multi_reduction <add>, %201, %cst_59 [1, 2] : vector<1x8x128xf32> to vector<1xf32>
    %203 = vector.shape_cast %202 : vector<1xf32> to vector<1x1x1xf32>
    %204 = vector.extract %203[0, 0, 0] : f32 from vector<1x1x1xf32>
    %205 = vector.broadcast %204 : f32 to vector<1x1xf32>
    %206 = arith.cmpf oge, %205, %134 : vector<1x1xf32>
    %207 = arith.select %206, %195, %193 : vector<1x1xi1>, vector<1x1xi32>
    %c33554432_i32 = arith.constant 33554432 : i32
    %208 = vector.broadcast %c33554432_i32 : i32 to vector<1x1xi32>
    %209 = arith.ori %207, %208 : vector<1x1xi32>
    %210 = vector.broadcast %209 : vector<1x1xi32> to vector<8x128xi32>
    %211 = arith.cmpi sge, %136, %210 : vector<8x128xi32>
    %cst_60 = arith.constant 1.000000e+00 : f32
    %cst_61 = arith.constant 0.000000e+00 : f32
    %212 = vector.broadcast %cst_60 : f32 to vector<8x128xf32>
    %213 = vector.broadcast %cst_61 : f32 to vector<8x128xf32>
    %214 = arith.select %211, %212, %213 : vector<8x128xi1>, vector<8x128xf32>
    %215 = vector.shape_cast %214 : vector<8x128xf32> to vector<1x8x128xf32>
    %cst_62 = arith.constant dense<0.000000e+00> : vector<1xf32>
    %216 = vector.multi_reduction <add>, %215, %cst_62 [1, 2] : vector<1x8x128xf32> to vector<1xf32>
    %217 = vector.shape_cast %216 : vector<1xf32> to vector<1x1x1xf32>
    %218 = vector.extract %217[0, 0, 0] : f32 from vector<1x1x1xf32>
    %219 = vector.broadcast %218 : f32 to vector<1x1xf32>
    %220 = arith.cmpf oge, %219, %134 : vector<1x1xf32>
    %221 = arith.select %220, %209, %207 : vector<1x1xi1>, vector<1x1xi32>
    %c16777216_i32 = arith.constant 16777216 : i32
    %222 = vector.broadcast %c16777216_i32 : i32 to vector<1x1xi32>
    %223 = arith.ori %221, %222 : vector<1x1xi32>
    %224 = vector.broadcast %223 : vector<1x1xi32> to vector<8x128xi32>
    %225 = arith.cmpi sge, %136, %224 : vector<8x128xi32>
    %cst_63 = arith.constant 1.000000e+00 : f32
    %cst_64 = arith.constant 0.000000e+00 : f32
    %226 = vector.broadcast %cst_63 : f32 to vector<8x128xf32>
    %227 = vector.broadcast %cst_64 : f32 to vector<8x128xf32>
    %228 = arith.select %225, %226, %227 : vector<8x128xi1>, vector<8x128xf32>
    %229 = vector.shape_cast %228 : vector<8x128xf32> to vector<1x8x128xf32>
    %cst_65 = arith.constant dense<0.000000e+00> : vector<1xf32>
    %230 = vector.multi_reduction <add>, %229, %cst_65 [1, 2] : vector<1x8x128xf32> to vector<1xf32>
    %231 = vector.shape_cast %230 : vector<1xf32> to vector<1x1x1xf32>
    %232 = vector.extract %231[0, 0, 0] : f32 from vector<1x1x1xf32>
    %233 = vector.broadcast %232 : f32 to vector<1x1xf32>
    %234 = arith.cmpf oge, %233, %134 : vector<1x1xf32>
    %235 = arith.select %234, %223, %221 : vector<1x1xi1>, vector<1x1xi32>
    %c8388608_i32 = arith.constant 8388608 : i32
    %236 = vector.broadcast %c8388608_i32 : i32 to vector<1x1xi32>
    %237 = arith.ori %235, %236 : vector<1x1xi32>
    %238 = vector.broadcast %237 : vector<1x1xi32> to vector<8x128xi32>
    %239 = arith.cmpi sge, %136, %238 : vector<8x128xi32>
    %cst_66 = arith.constant 1.000000e+00 : f32
    %cst_67 = arith.constant 0.000000e+00 : f32
    %240 = vector.broadcast %cst_66 : f32 to vector<8x128xf32>
    %241 = vector.broadcast %cst_67 : f32 to vector<8x128xf32>
    %242 = arith.select %239, %240, %241 : vector<8x128xi1>, vector<8x128xf32>
    %243 = vector.shape_cast %242 : vector<8x128xf32> to vector<1x8x128xf32>
    %cst_68 = arith.constant dense<0.000000e+00> : vector<1xf32>
    %244 = vector.multi_reduction <add>, %243, %cst_68 [1, 2] : vector<1x8x128xf32> to vector<1xf32>
    %245 = vector.shape_cast %244 : vector<1xf32> to vector<1x1x1xf32>
    %246 = vector.extract %245[0, 0, 0] : f32 from vector<1x1x1xf32>
    %247 = vector.broadcast %246 : f32 to vector<1x1xf32>
    %248 = arith.cmpf oge, %247, %134 : vector<1x1xf32>
    %249 = arith.select %248, %237, %235 : vector<1x1xi1>, vector<1x1xi32>
    %c4194304_i32 = arith.constant 4194304 : i32
    %250 = vector.broadcast %c4194304_i32 : i32 to vector<1x1xi32>
    %251 = arith.ori %249, %250 : vector<1x1xi32>
    %252 = vector.broadcast %251 : vector<1x1xi32> to vector<8x128xi32>
    %253 = arith.cmpi sge, %136, %252 : vector<8x128xi32>
    %cst_69 = arith.constant 1.000000e+00 : f32
    %cst_70 = arith.constant 0.000000e+00 : f32
    %254 = vector.broadcast %cst_69 : f32 to vector<8x128xf32>
    %255 = vector.broadcast %cst_70 : f32 to vector<8x128xf32>
    %256 = arith.select %253, %254, %255 : vector<8x128xi1>, vector<8x128xf32>
    %257 = vector.shape_cast %256 : vector<8x128xf32> to vector<1x8x128xf32>
    %cst_71 = arith.constant dense<0.000000e+00> : vector<1xf32>
    %258 = vector.multi_reduction <add>, %257, %cst_71 [1, 2] : vector<1x8x128xf32> to vector<1xf32>
    %259 = vector.shape_cast %258 : vector<1xf32> to vector<1x1x1xf32>
    %260 = vector.extract %259[0, 0, 0] : f32 from vector<1x1x1xf32>
    %261 = vector.broadcast %260 : f32 to vector<1x1xf32>
    %262 = arith.cmpf oge, %261, %134 : vector<1x1xf32>
    %263 = arith.select %262, %251, %249 : vector<1x1xi1>, vector<1x1xi32>
    %c2097152_i32 = arith.constant 2097152 : i32
    %264 = vector.broadcast %c2097152_i32 : i32 to vector<1x1xi32>
    %265 = arith.ori %263, %264 : vector<1x1xi32>
    %266 = vector.broadcast %265 : vector<1x1xi32> to vector<8x128xi32>
    %267 = arith.cmpi sge, %136, %266 : vector<8x128xi32>
    %cst_72 = arith.constant 1.000000e+00 : f32
    %cst_73 = arith.constant 0.000000e+00 : f32
    %268 = vector.broadcast %cst_72 : f32 to vector<8x128xf32>
    %269 = vector.broadcast %cst_73 : f32 to vector<8x128xf32>
    %270 = arith.select %267, %268, %269 : vector<8x128xi1>, vector<8x128xf32>
    %271 = vector.shape_cast %270 : vector<8x128xf32> to vector<1x8x128xf32>
    %cst_74 = arith.constant dense<0.000000e+00> : vector<1xf32>
    %272 = vector.multi_reduction <add>, %271, %cst_74 [1, 2] : vector<1x8x128xf32> to vector<1xf32>
    %273 = vector.shape_cast %272 : vector<1xf32> to vector<1x1x1xf32>
    %274 = vector.extract %273[0, 0, 0] : f32 from vector<1x1x1xf32>
    %275 = vector.broadcast %274 : f32 to vector<1x1xf32>
    %276 = arith.cmpf oge, %275, %134 : vector<1x1xf32>
    %277 = arith.select %276, %265, %263 : vector<1x1xi1>, vector<1x1xi32>
    %c1048576_i32 = arith.constant 1048576 : i32
    %278 = vector.broadcast %c1048576_i32 : i32 to vector<1x1xi32>
    %279 = arith.ori %277, %278 : vector<1x1xi32>
    %280 = vector.broadcast %279 : vector<1x1xi32> to vector<8x128xi32>
    %281 = arith.cmpi sge, %136, %280 : vector<8x128xi32>
    %cst_75 = arith.constant 1.000000e+00 : f32
    %cst_76 = arith.constant 0.000000e+00 : f32
    %282 = vector.broadcast %cst_75 : f32 to vector<8x128xf32>
    %283 = vector.broadcast %cst_76 : f32 to vector<8x128xf32>
    %284 = arith.select %281, %282, %283 : vector<8x128xi1>, vector<8x128xf32>
    %285 = vector.shape_cast %284 : vector<8x128xf32> to vector<1x8x128xf32>
    %cst_77 = arith.constant dense<0.000000e+00> : vector<1xf32>
    %286 = vector.multi_reduction <add>, %285, %cst_77 [1, 2] : vector<1x8x128xf32> to vector<1xf32>
    %287 = vector.shape_cast %286 : vector<1xf32> to vector<1x1x1xf32>
    %288 = vector.extract %287[0, 0, 0] : f32 from vector<1x1x1xf32>
    %289 = vector.broadcast %288 : f32 to vector<1x1xf32>
    %290 = arith.cmpf oge, %289, %134 : vector<1x1xf32>
    %291 = arith.select %290, %279, %277 : vector<1x1xi1>, vector<1x1xi32>
    %c524288_i32 = arith.constant 524288 : i32
    %292 = vector.broadcast %c524288_i32 : i32 to vector<1x1xi32>
    %293 = arith.ori %291, %292 : vector<1x1xi32>
    %294 = vector.broadcast %293 : vector<1x1xi32> to vector<8x128xi32>
    %295 = arith.cmpi sge, %136, %294 : vector<8x128xi32>
    %cst_78 = arith.constant 1.000000e+00 : f32
    %cst_79 = arith.constant 0.000000e+00 : f32
    %296 = vector.broadcast %cst_78 : f32 to vector<8x128xf32>
    %297 = vector.broadcast %cst_79 : f32 to vector<8x128xf32>
    %298 = arith.select %295, %296, %297 : vector<8x128xi1>, vector<8x128xf32>
    %299 = vector.shape_cast %298 : vector<8x128xf32> to vector<1x8x128xf32>
    %cst_80 = arith.constant dense<0.000000e+00> : vector<1xf32>
    %300 = vector.multi_reduction <add>, %299, %cst_80 [1, 2] : vector<1x8x128xf32> to vector<1xf32>
    %301 = vector.shape_cast %300 : vector<1xf32> to vector<1x1x1xf32>
    %302 = vector.extract %301[0, 0, 0] : f32 from vector<1x1x1xf32>
    %303 = vector.broadcast %302 : f32 to vector<1x1xf32>
    %304 = arith.cmpf oge, %303, %134 : vector<1x1xf32>
    %305 = arith.select %304, %293, %291 : vector<1x1xi1>, vector<1x1xi32>
    %c262144_i32 = arith.constant 262144 : i32
    %306 = vector.broadcast %c262144_i32 : i32 to vector<1x1xi32>
    %307 = arith.ori %305, %306 : vector<1x1xi32>
    %308 = vector.broadcast %307 : vector<1x1xi32> to vector<8x128xi32>
    %309 = arith.cmpi sge, %136, %308 : vector<8x128xi32>
    %cst_81 = arith.constant 1.000000e+00 : f32
    %cst_82 = arith.constant 0.000000e+00 : f32
    %310 = vector.broadcast %cst_81 : f32 to vector<8x128xf32>
    %311 = vector.broadcast %cst_82 : f32 to vector<8x128xf32>
    %312 = arith.select %309, %310, %311 : vector<8x128xi1>, vector<8x128xf32>
    %313 = vector.shape_cast %312 : vector<8x128xf32> to vector<1x8x128xf32>
    %cst_83 = arith.constant dense<0.000000e+00> : vector<1xf32>
    %314 = vector.multi_reduction <add>, %313, %cst_83 [1, 2] : vector<1x8x128xf32> to vector<1xf32>
    %315 = vector.shape_cast %314 : vector<1xf32> to vector<1x1x1xf32>
    %316 = vector.extract %315[0, 0, 0] : f32 from vector<1x1x1xf32>
    %317 = vector.broadcast %316 : f32 to vector<1x1xf32>
    %318 = arith.cmpf oge, %317, %134 : vector<1x1xf32>
    %319 = arith.select %318, %307, %305 : vector<1x1xi1>, vector<1x1xi32>
    %c131072_i32 = arith.constant 131072 : i32
    %320 = vector.broadcast %c131072_i32 : i32 to vector<1x1xi32>
    %321 = arith.ori %319, %320 : vector<1x1xi32>
    %322 = vector.broadcast %321 : vector<1x1xi32> to vector<8x128xi32>
    %323 = arith.cmpi sge, %136, %322 : vector<8x128xi32>
    %cst_84 = arith.constant 1.000000e+00 : f32
    %cst_85 = arith.constant 0.000000e+00 : f32
    %324 = vector.broadcast %cst_84 : f32 to vector<8x128xf32>
    %325 = vector.broadcast %cst_85 : f32 to vector<8x128xf32>
    %326 = arith.select %323, %324, %325 : vector<8x128xi1>, vector<8x128xf32>
    %327 = vector.shape_cast %326 : vector<8x128xf32> to vector<1x8x128xf32>
    %cst_86 = arith.constant dense<0.000000e+00> : vector<1xf32>
    %328 = vector.multi_reduction <add>, %327, %cst_86 [1, 2] : vector<1x8x128xf32> to vector<1xf32>
    %329 = vector.shape_cast %328 : vector<1xf32> to vector<1x1x1xf32>
    %330 = vector.extract %329[0, 0, 0] : f32 from vector<1x1x1xf32>
    %331 = vector.broadcast %330 : f32 to vector<1x1xf32>
    %332 = arith.cmpf oge, %331, %134 : vector<1x1xf32>
    %333 = arith.select %332, %321, %319 : vector<1x1xi1>, vector<1x1xi32>
    %c65536_i32 = arith.constant 65536 : i32
    %334 = vector.broadcast %c65536_i32 : i32 to vector<1x1xi32>
    %335 = arith.ori %333, %334 : vector<1x1xi32>
    %336 = vector.broadcast %335 : vector<1x1xi32> to vector<8x128xi32>
    %337 = arith.cmpi sge, %136, %336 : vector<8x128xi32>
    %cst_87 = arith.constant 1.000000e+00 : f32
    %cst_88 = arith.constant 0.000000e+00 : f32
    %338 = vector.broadcast %cst_87 : f32 to vector<8x128xf32>
    %339 = vector.broadcast %cst_88 : f32 to vector<8x128xf32>
    %340 = arith.select %337, %338, %339 : vector<8x128xi1>, vector<8x128xf32>
    %341 = vector.shape_cast %340 : vector<8x128xf32> to vector<1x8x128xf32>
    %cst_89 = arith.constant dense<0.000000e+00> : vector<1xf32>
    %342 = vector.multi_reduction <add>, %341, %cst_89 [1, 2] : vector<1x8x128xf32> to vector<1xf32>
    %343 = vector.shape_cast %342 : vector<1xf32> to vector<1x1x1xf32>
    %344 = vector.extract %343[0, 0, 0] : f32 from vector<1x1x1xf32>
    %345 = vector.broadcast %344 : f32 to vector<1x1xf32>
    %346 = arith.cmpf oge, %345, %134 : vector<1x1xf32>
    %347 = arith.select %346, %335, %333 : vector<1x1xi1>, vector<1x1xi32>
    %c32768_i32 = arith.constant 32768 : i32
    %348 = vector.broadcast %c32768_i32 : i32 to vector<1x1xi32>
    %349 = arith.ori %347, %348 : vector<1x1xi32>
    %350 = vector.broadcast %349 : vector<1x1xi32> to vector<8x128xi32>
    %351 = arith.cmpi sge, %136, %350 : vector<8x128xi32>
    %cst_90 = arith.constant 1.000000e+00 : f32
    %cst_91 = arith.constant 0.000000e+00 : f32
    %352 = vector.broadcast %cst_90 : f32 to vector<8x128xf32>
    %353 = vector.broadcast %cst_91 : f32 to vector<8x128xf32>
    %354 = arith.select %351, %352, %353 : vector<8x128xi1>, vector<8x128xf32>
    %355 = vector.shape_cast %354 : vector<8x128xf32> to vector<1x8x128xf32>
    %cst_92 = arith.constant dense<0.000000e+00> : vector<1xf32>
    %356 = vector.multi_reduction <add>, %355, %cst_92 [1, 2] : vector<1x8x128xf32> to vector<1xf32>
    %357 = vector.shape_cast %356 : vector<1xf32> to vector<1x1x1xf32>
    %358 = vector.extract %357[0, 0, 0] : f32 from vector<1x1x1xf32>
    %359 = vector.broadcast %358 : f32 to vector<1x1xf32>
    %360 = arith.cmpf oge, %359, %134 : vector<1x1xf32>
    %361 = arith.select %360, %349, %347 : vector<1x1xi1>, vector<1x1xi32>
    %c16384_i32 = arith.constant 16384 : i32
    %362 = vector.broadcast %c16384_i32 : i32 to vector<1x1xi32>
    %363 = arith.ori %361, %362 : vector<1x1xi32>
    %364 = vector.broadcast %363 : vector<1x1xi32> to vector<8x128xi32>
    %365 = arith.cmpi sge, %136, %364 : vector<8x128xi32>
    %cst_93 = arith.constant 1.000000e+00 : f32
    %cst_94 = arith.constant 0.000000e+00 : f32
    %366 = vector.broadcast %cst_93 : f32 to vector<8x128xf32>
    %367 = vector.broadcast %cst_94 : f32 to vector<8x128xf32>
    %368 = arith.select %365, %366, %367 : vector<8x128xi1>, vector<8x128xf32>
    %369 = vector.shape_cast %368 : vector<8x128xf32> to vector<1x8x128xf32>
    %cst_95 = arith.constant dense<0.000000e+00> : vector<1xf32>
    %370 = vector.multi_reduction <add>, %369, %cst_95 [1, 2] : vector<1x8x128xf32> to vector<1xf32>
    %371 = vector.shape_cast %370 : vector<1xf32> to vector<1x1x1xf32>
    %372 = vector.extract %371[0, 0, 0] : f32 from vector<1x1x1xf32>
    %373 = vector.broadcast %372 : f32 to vector<1x1xf32>
    %374 = arith.cmpf oge, %373, %134 : vector<1x1xf32>
    %375 = arith.select %374, %363, %361 : vector<1x1xi1>, vector<1x1xi32>
    %c8192_i32 = arith.constant 8192 : i32
    %376 = vector.broadcast %c8192_i32 : i32 to vector<1x1xi32>
    %377 = arith.ori %375, %376 : vector<1x1xi32>
    %378 = vector.broadcast %377 : vector<1x1xi32> to vector<8x128xi32>
    %379 = arith.cmpi sge, %136, %378 : vector<8x128xi32>
    %cst_96 = arith.constant 1.000000e+00 : f32
    %cst_97 = arith.constant 0.000000e+00 : f32
    %380 = vector.broadcast %cst_96 : f32 to vector<8x128xf32>
    %381 = vector.broadcast %cst_97 : f32 to vector<8x128xf32>
    %382 = arith.select %379, %380, %381 : vector<8x128xi1>, vector<8x128xf32>
    %383 = vector.shape_cast %382 : vector<8x128xf32> to vector<1x8x128xf32>
    %cst_98 = arith.constant dense<0.000000e+00> : vector<1xf32>
    %384 = vector.multi_reduction <add>, %383, %cst_98 [1, 2] : vector<1x8x128xf32> to vector<1xf32>
    %385 = vector.shape_cast %384 : vector<1xf32> to vector<1x1x1xf32>
    %386 = vector.extract %385[0, 0, 0] : f32 from vector<1x1x1xf32>
    %387 = vector.broadcast %386 : f32 to vector<1x1xf32>
    %388 = arith.cmpf oge, %387, %134 : vector<1x1xf32>
    %389 = arith.select %388, %377, %375 : vector<1x1xi1>, vector<1x1xi32>
    %c4096_i32 = arith.constant 4096 : i32
    %390 = vector.broadcast %c4096_i32 : i32 to vector<1x1xi32>
    %391 = arith.ori %389, %390 : vector<1x1xi32>
    %392 = vector.broadcast %391 : vector<1x1xi32> to vector<8x128xi32>
    %393 = arith.cmpi sge, %136, %392 : vector<8x128xi32>
    %cst_99 = arith.constant 1.000000e+00 : f32
    %cst_100 = arith.constant 0.000000e+00 : f32
    %394 = vector.broadcast %cst_99 : f32 to vector<8x128xf32>
    %395 = vector.broadcast %cst_100 : f32 to vector<8x128xf32>
    %396 = arith.select %393, %394, %395 : vector<8x128xi1>, vector<8x128xf32>
    %397 = vector.shape_cast %396 : vector<8x128xf32> to vector<1x8x128xf32>
    %cst_101 = arith.constant dense<0.000000e+00> : vector<1xf32>
    %398 = vector.multi_reduction <add>, %397, %cst_101 [1, 2] : vector<1x8x128xf32> to vector<1xf32>
    %399 = vector.shape_cast %398 : vector<1xf32> to vector<1x1x1xf32>
    %400 = vector.extract %399[0, 0, 0] : f32 from vector<1x1x1xf32>
    %401 = vector.broadcast %400 : f32 to vector<1x1xf32>
    %402 = arith.cmpf oge, %401, %134 : vector<1x1xf32>
    %403 = arith.select %402, %391, %389 : vector<1x1xi1>, vector<1x1xi32>
    %c2048_i32 = arith.constant 2048 : i32
    %404 = vector.broadcast %c2048_i32 : i32 to vector<1x1xi32>
    %405 = arith.ori %403, %404 : vector<1x1xi32>
    %406 = vector.broadcast %405 : vector<1x1xi32> to vector<8x128xi32>
    %407 = arith.cmpi sge, %136, %406 : vector<8x128xi32>
    %cst_102 = arith.constant 1.000000e+00 : f32
    %cst_103 = arith.constant 0.000000e+00 : f32
    %408 = vector.broadcast %cst_102 : f32 to vector<8x128xf32>
    %409 = vector.broadcast %cst_103 : f32 to vector<8x128xf32>
    %410 = arith.select %407, %408, %409 : vector<8x128xi1>, vector<8x128xf32>
    %411 = vector.shape_cast %410 : vector<8x128xf32> to vector<1x8x128xf32>
    %cst_104 = arith.constant dense<0.000000e+00> : vector<1xf32>
    %412 = vector.multi_reduction <add>, %411, %cst_104 [1, 2] : vector<1x8x128xf32> to vector<1xf32>
    %413 = vector.shape_cast %412 : vector<1xf32> to vector<1x1x1xf32>
    %414 = vector.extract %413[0, 0, 0] : f32 from vector<1x1x1xf32>
    %415 = vector.broadcast %414 : f32 to vector<1x1xf32>
    %416 = arith.cmpf oge, %415, %134 : vector<1x1xf32>
    %417 = arith.select %416, %405, %403 : vector<1x1xi1>, vector<1x1xi32>
    %c1024_i32 = arith.constant 1024 : i32
    %418 = vector.broadcast %c1024_i32 : i32 to vector<1x1xi32>
    %419 = arith.ori %417, %418 : vector<1x1xi32>
    %420 = vector.broadcast %419 : vector<1x1xi32> to vector<8x128xi32>
    %421 = arith.cmpi sge, %136, %420 : vector<8x128xi32>
    %cst_105 = arith.constant 1.000000e+00 : f32
    %cst_106 = arith.constant 0.000000e+00 : f32
    %422 = vector.broadcast %cst_105 : f32 to vector<8x128xf32>
    %423 = vector.broadcast %cst_106 : f32 to vector<8x128xf32>
    %424 = arith.select %421, %422, %423 : vector<8x128xi1>, vector<8x128xf32>
    %425 = vector.shape_cast %424 : vector<8x128xf32> to vector<1x8x128xf32>
    %cst_107 = arith.constant dense<0.000000e+00> : vector<1xf32>
    %426 = vector.multi_reduction <add>, %425, %cst_107 [1, 2] : vector<1x8x128xf32> to vector<1xf32>
    %427 = vector.shape_cast %426 : vector<1xf32> to vector<1x1x1xf32>
    %428 = vector.extract %427[0, 0, 0] : f32 from vector<1x1x1xf32>
    %429 = vector.broadcast %428 : f32 to vector<1x1xf32>
    %430 = arith.cmpf oge, %429, %134 : vector<1x1xf32>
    %431 = arith.select %430, %419, %417 : vector<1x1xi1>, vector<1x1xi32>
    %c512_i32 = arith.constant 512 : i32
    %432 = vector.broadcast %c512_i32 : i32 to vector<1x1xi32>
    %433 = arith.ori %431, %432 : vector<1x1xi32>
    %434 = vector.broadcast %433 : vector<1x1xi32> to vector<8x128xi32>
    %435 = arith.cmpi sge, %136, %434 : vector<8x128xi32>
    %cst_108 = arith.constant 1.000000e+00 : f32
    %cst_109 = arith.constant 0.000000e+00 : f32
    %436 = vector.broadcast %cst_108 : f32 to vector<8x128xf32>
    %437 = vector.broadcast %cst_109 : f32 to vector<8x128xf32>
    %438 = arith.select %435, %436, %437 : vector<8x128xi1>, vector<8x128xf32>
    %439 = vector.shape_cast %438 : vector<8x128xf32> to vector<1x8x128xf32>
    %cst_110 = arith.constant dense<0.000000e+00> : vector<1xf32>
    %440 = vector.multi_reduction <add>, %439, %cst_110 [1, 2] : vector<1x8x128xf32> to vector<1xf32>
    %441 = vector.shape_cast %440 : vector<1xf32> to vector<1x1x1xf32>
    %442 = vector.extract %441[0, 0, 0] : f32 from vector<1x1x1xf32>
    %443 = vector.broadcast %442 : f32 to vector<1x1xf32>
    %444 = arith.cmpf oge, %443, %134 : vector<1x1xf32>
    %445 = arith.select %444, %433, %431 : vector<1x1xi1>, vector<1x1xi32>
    %c256_i32 = arith.constant 256 : i32
    %446 = vector.broadcast %c256_i32 : i32 to vector<1x1xi32>
    %447 = arith.ori %445, %446 : vector<1x1xi32>
    %448 = vector.broadcast %447 : vector<1x1xi32> to vector<8x128xi32>
    %449 = arith.cmpi sge, %136, %448 : vector<8x128xi32>
    %cst_111 = arith.constant 1.000000e+00 : f32
    %cst_112 = arith.constant 0.000000e+00 : f32
    %450 = vector.broadcast %cst_111 : f32 to vector<8x128xf32>
    %451 = vector.broadcast %cst_112 : f32 to vector<8x128xf32>
    %452 = arith.select %449, %450, %451 : vector<8x128xi1>, vector<8x128xf32>
    %453 = vector.shape_cast %452 : vector<8x128xf32> to vector<1x8x128xf32>
    %cst_113 = arith.constant dense<0.000000e+00> : vector<1xf32>
    %454 = vector.multi_reduction <add>, %453, %cst_113 [1, 2] : vector<1x8x128xf32> to vector<1xf32>
    %455 = vector.shape_cast %454 : vector<1xf32> to vector<1x1x1xf32>
    %456 = vector.extract %455[0, 0, 0] : f32 from vector<1x1x1xf32>
    %457 = vector.broadcast %456 : f32 to vector<1x1xf32>
    %458 = arith.cmpf oge, %457, %134 : vector<1x1xf32>
    %459 = arith.select %458, %447, %445 : vector<1x1xi1>, vector<1x1xi32>
    %c128_i32_114 = arith.constant 128 : i32
    %460 = vector.broadcast %c128_i32_114 : i32 to vector<1x1xi32>
    %461 = arith.ori %459, %460 : vector<1x1xi32>
    %462 = vector.broadcast %461 : vector<1x1xi32> to vector<8x128xi32>
    %463 = arith.cmpi sge, %136, %462 : vector<8x128xi32>
    %cst_115 = arith.constant 1.000000e+00 : f32
    %cst_116 = arith.constant 0.000000e+00 : f32
    %464 = vector.broadcast %cst_115 : f32 to vector<8x128xf32>
    %465 = vector.broadcast %cst_116 : f32 to vector<8x128xf32>
    %466 = arith.select %463, %464, %465 : vector<8x128xi1>, vector<8x128xf32>
    %467 = vector.shape_cast %466 : vector<8x128xf32> to vector<1x8x128xf32>
    %cst_117 = arith.constant dense<0.000000e+00> : vector<1xf32>
    %468 = vector.multi_reduction <add>, %467, %cst_117 [1, 2] : vector<1x8x128xf32> to vector<1xf32>
    %469 = vector.shape_cast %468 : vector<1xf32> to vector<1x1x1xf32>
    %470 = vector.extract %469[0, 0, 0] : f32 from vector<1x1x1xf32>
    %471 = vector.broadcast %470 : f32 to vector<1x1xf32>
    %472 = arith.cmpf oge, %471, %134 : vector<1x1xf32>
    %473 = arith.select %472, %461, %459 : vector<1x1xi1>, vector<1x1xi32>
    %c64_i32 = arith.constant 64 : i32
    %474 = vector.broadcast %c64_i32 : i32 to vector<1x1xi32>
    %475 = arith.ori %473, %474 : vector<1x1xi32>
    %476 = vector.broadcast %475 : vector<1x1xi32> to vector<8x128xi32>
    %477 = arith.cmpi sge, %136, %476 : vector<8x128xi32>
    %cst_118 = arith.constant 1.000000e+00 : f32
    %cst_119 = arith.constant 0.000000e+00 : f32
    %478 = vector.broadcast %cst_118 : f32 to vector<8x128xf32>
    %479 = vector.broadcast %cst_119 : f32 to vector<8x128xf32>
    %480 = arith.select %477, %478, %479 : vector<8x128xi1>, vector<8x128xf32>
    %481 = vector.shape_cast %480 : vector<8x128xf32> to vector<1x8x128xf32>
    %cst_120 = arith.constant dense<0.000000e+00> : vector<1xf32>
    %482 = vector.multi_reduction <add>, %481, %cst_120 [1, 2] : vector<1x8x128xf32> to vector<1xf32>
    %483 = vector.shape_cast %482 : vector<1xf32> to vector<1x1x1xf32>
    %484 = vector.extract %483[0, 0, 0] : f32 from vector<1x1x1xf32>
    %485 = vector.broadcast %484 : f32 to vector<1x1xf32>
    %486 = arith.cmpf oge, %485, %134 : vector<1x1xf32>
    %487 = arith.select %486, %475, %473 : vector<1x1xi1>, vector<1x1xi32>
    %c32_i32 = arith.constant 32 : i32
    %488 = vector.broadcast %c32_i32 : i32 to vector<1x1xi32>
    %489 = arith.ori %487, %488 : vector<1x1xi32>
    %490 = vector.broadcast %489 : vector<1x1xi32> to vector<8x128xi32>
    %491 = arith.cmpi sge, %136, %490 : vector<8x128xi32>
    %cst_121 = arith.constant 1.000000e+00 : f32
    %cst_122 = arith.constant 0.000000e+00 : f32
    %492 = vector.broadcast %cst_121 : f32 to vector<8x128xf32>
    %493 = vector.broadcast %cst_122 : f32 to vector<8x128xf32>
    %494 = arith.select %491, %492, %493 : vector<8x128xi1>, vector<8x128xf32>
    %495 = vector.shape_cast %494 : vector<8x128xf32> to vector<1x8x128xf32>
    %cst_123 = arith.constant dense<0.000000e+00> : vector<1xf32>
    %496 = vector.multi_reduction <add>, %495, %cst_123 [1, 2] : vector<1x8x128xf32> to vector<1xf32>
    %497 = vector.shape_cast %496 : vector<1xf32> to vector<1x1x1xf32>
    %498 = vector.extract %497[0, 0, 0] : f32 from vector<1x1x1xf32>
    %499 = vector.broadcast %498 : f32 to vector<1x1xf32>
    %500 = arith.cmpf oge, %499, %134 : vector<1x1xf32>
    %501 = arith.select %500, %489, %487 : vector<1x1xi1>, vector<1x1xi32>
    %c16_i32 = arith.constant 16 : i32
    %502 = vector.broadcast %c16_i32 : i32 to vector<1x1xi32>
    %503 = arith.ori %501, %502 : vector<1x1xi32>
    %504 = vector.broadcast %503 : vector<1x1xi32> to vector<8x128xi32>
    %505 = arith.cmpi sge, %136, %504 : vector<8x128xi32>
    %cst_124 = arith.constant 1.000000e+00 : f32
    %cst_125 = arith.constant 0.000000e+00 : f32
    %506 = vector.broadcast %cst_124 : f32 to vector<8x128xf32>
    %507 = vector.broadcast %cst_125 : f32 to vector<8x128xf32>
    %508 = arith.select %505, %506, %507 : vector<8x128xi1>, vector<8x128xf32>
    %509 = vector.shape_cast %508 : vector<8x128xf32> to vector<1x8x128xf32>
    %cst_126 = arith.constant dense<0.000000e+00> : vector<1xf32>
    %510 = vector.multi_reduction <add>, %509, %cst_126 [1, 2] : vector<1x8x128xf32> to vector<1xf32>
    %511 = vector.shape_cast %510 : vector<1xf32> to vector<1x1x1xf32>
    %512 = vector.extract %511[0, 0, 0] : f32 from vector<1x1x1xf32>
    %513 = vector.broadcast %512 : f32 to vector<1x1xf32>
    %514 = arith.cmpf oge, %513, %134 : vector<1x1xf32>
    %515 = arith.select %514, %503, %501 : vector<1x1xi1>, vector<1x1xi32>
    %c8_i32 = arith.constant 8 : i32
    %516 = vector.broadcast %c8_i32 : i32 to vector<1x1xi32>
    %517 = arith.ori %515, %516 : vector<1x1xi32>
    %518 = vector.broadcast %517 : vector<1x1xi32> to vector<8x128xi32>
    %519 = arith.cmpi sge, %136, %518 : vector<8x128xi32>
    %cst_127 = arith.constant 1.000000e+00 : f32
    %cst_128 = arith.constant 0.000000e+00 : f32
    %520 = vector.broadcast %cst_127 : f32 to vector<8x128xf32>
    %521 = vector.broadcast %cst_128 : f32 to vector<8x128xf32>
    %522 = arith.select %519, %520, %521 : vector<8x128xi1>, vector<8x128xf32>
    %523 = vector.shape_cast %522 : vector<8x128xf32> to vector<1x8x128xf32>
    %cst_129 = arith.constant dense<0.000000e+00> : vector<1xf32>
    %524 = vector.multi_reduction <add>, %523, %cst_129 [1, 2] : vector<1x8x128xf32> to vector<1xf32>
    %525 = vector.shape_cast %524 : vector<1xf32> to vector<1x1x1xf32>
    %526 = vector.extract %525[0, 0, 0] : f32 from vector<1x1x1xf32>
    %527 = vector.broadcast %526 : f32 to vector<1x1xf32>
    %528 = arith.cmpf oge, %527, %134 : vector<1x1xf32>
    %529 = arith.select %528, %517, %515 : vector<1x1xi1>, vector<1x1xi32>
    %c4_i32 = arith.constant 4 : i32
    %530 = vector.broadcast %c4_i32 : i32 to vector<1x1xi32>
    %531 = arith.ori %529, %530 : vector<1x1xi32>
    %532 = vector.broadcast %531 : vector<1x1xi32> to vector<8x128xi32>
    %533 = arith.cmpi sge, %136, %532 : vector<8x128xi32>
    %cst_130 = arith.constant 1.000000e+00 : f32
    %cst_131 = arith.constant 0.000000e+00 : f32
    %534 = vector.broadcast %cst_130 : f32 to vector<8x128xf32>
    %535 = vector.broadcast %cst_131 : f32 to vector<8x128xf32>
    %536 = arith.select %533, %534, %535 : vector<8x128xi1>, vector<8x128xf32>
    %537 = vector.shape_cast %536 : vector<8x128xf32> to vector<1x8x128xf32>
    %cst_132 = arith.constant dense<0.000000e+00> : vector<1xf32>
    %538 = vector.multi_reduction <add>, %537, %cst_132 [1, 2] : vector<1x8x128xf32> to vector<1xf32>
    %539 = vector.shape_cast %538 : vector<1xf32> to vector<1x1x1xf32>
    %540 = vector.extract %539[0, 0, 0] : f32 from vector<1x1x1xf32>
    %541 = vector.broadcast %540 : f32 to vector<1x1xf32>
    %542 = arith.cmpf oge, %541, %134 : vector<1x1xf32>
    %543 = arith.select %542, %531, %529 : vector<1x1xi1>, vector<1x1xi32>
    %c2_i32 = arith.constant 2 : i32
    %544 = vector.broadcast %c2_i32 : i32 to vector<1x1xi32>
    %545 = arith.ori %543, %544 : vector<1x1xi32>
    %546 = vector.broadcast %545 : vector<1x1xi32> to vector<8x128xi32>
    %547 = arith.cmpi sge, %136, %546 : vector<8x128xi32>
    %cst_133 = arith.constant 1.000000e+00 : f32
    %cst_134 = arith.constant 0.000000e+00 : f32
    %548 = vector.broadcast %cst_133 : f32 to vector<8x128xf32>
    %549 = vector.broadcast %cst_134 : f32 to vector<8x128xf32>
    %550 = arith.select %547, %548, %549 : vector<8x128xi1>, vector<8x128xf32>
    %551 = vector.shape_cast %550 : vector<8x128xf32> to vector<1x8x128xf32>
    %cst_135 = arith.constant dense<0.000000e+00> : vector<1xf32>
    %552 = vector.multi_reduction <add>, %551, %cst_135 [1, 2] : vector<1x8x128xf32> to vector<1xf32>
    %553 = vector.shape_cast %552 : vector<1xf32> to vector<1x1x1xf32>
    %554 = vector.extract %553[0, 0, 0] : f32 from vector<1x1x1xf32>
    %555 = vector.broadcast %554 : f32 to vector<1x1xf32>
    %556 = arith.cmpf oge, %555, %134 : vector<1x1xf32>
    %557 = arith.select %556, %545, %543 : vector<1x1xi1>, vector<1x1xi32>
    %c1_i32_136 = arith.constant 1 : i32
    %558 = vector.broadcast %c1_i32_136 : i32 to vector<1x1xi32>
    %559 = arith.ori %557, %558 : vector<1x1xi32>
    %560 = vector.broadcast %559 : vector<1x1xi32> to vector<8x128xi32>
    %561 = arith.cmpi sge, %136, %560 : vector<8x128xi32>
    %cst_137 = arith.constant 1.000000e+00 : f32
    %cst_138 = arith.constant 0.000000e+00 : f32
    %562 = vector.broadcast %cst_137 : f32 to vector<8x128xf32>
    %563 = vector.broadcast %cst_138 : f32 to vector<8x128xf32>
    %564 = arith.select %561, %562, %563 : vector<8x128xi1>, vector<8x128xf32>
    %565 = vector.shape_cast %564 : vector<8x128xf32> to vector<1x8x128xf32>
    %cst_139 = arith.constant dense<0.000000e+00> : vector<1xf32>
    %566 = vector.multi_reduction <add>, %565, %cst_139 [1, 2] : vector<1x8x128xf32> to vector<1xf32>
    %567 = vector.shape_cast %566 : vector<1xf32> to vector<1x1x1xf32>
    %568 = vector.extract %567[0, 0, 0] : f32 from vector<1x1x1xf32>
    %569 = vector.broadcast %568 : f32 to vector<1x1xf32>
    %570 = arith.cmpf oge, %569, %134 : vector<1x1xf32>
    %571 = arith.select %570, %559, %557 : vector<1x1xi1>, vector<1x1xi32>
    %572 = vector.broadcast %571 : vector<1x1xi32> to vector<8x128xi32>
    %573 = arith.cmpi sgt, %136, %572 : vector<8x128xi32>
    %cst_140 = arith.constant 1.000000e+00 : f32
    %cst_141 = arith.constant 0.000000e+00 : f32
    %574 = vector.broadcast %cst_140 : f32 to vector<8x128xf32>
    %575 = vector.broadcast %cst_141 : f32 to vector<8x128xf32>
    %576 = arith.select %573, %574, %575 : vector<8x128xi1>, vector<8x128xf32>
    %577 = vector.shape_cast %576 : vector<8x128xf32> to vector<1x8x128xf32>
    %cst_142 = arith.constant dense<0.000000e+00> : vector<1xf32>
    %578 = vector.multi_reduction <add>, %577, %cst_142 [1, 2] : vector<1x8x128xf32> to vector<1xf32>
    %579 = vector.shape_cast %578 : vector<1xf32> to vector<1x1x1xf32>
    %580 = vector.extract %579[0, 0, 0] : f32 from vector<1x1x1xf32>
    %581 = vector.broadcast %580 : f32 to vector<1x1xf32>
    %cst_143 = arith.constant 0.000000e+00 : f32
    %582 = vector.broadcast %cst_143 : f32 to vector<8x128xf32>
    %583 = arith.select %573, %135, %582 : vector<8x128xi1>, vector<8x128xf32>
    %584 = vector.shape_cast %583 : vector<8x128xf32> to vector<1x8x128xf32>
    %cst_144 = arith.constant dense<0.000000e+00> : vector<1xf32>
    %585 = vector.multi_reduction <add>, %584, %cst_144 [1, 2] : vector<1x8x128xf32> to vector<1xf32>
    %586 = vector.shape_cast %585 : vector<1xf32> to vector<1x1x1xf32>
    %587 = vector.extract %586[0, 0, 0] : f32 from vector<1x1x1xf32>
    %588 = vector.broadcast %587 : f32 to vector<1x1xf32>
    %589 = vector.broadcast %571 : vector<1x1xi32> to vector<8x128xi32>
    %590 = arith.cmpi eq, %136, %589 : vector<8x128xi32>
    %cst_145 = arith.constant 0.000000e+00 : f32
    %591 = vector.broadcast %cst_145 : f32 to vector<8x128xf32>
    %592 = arith.select %590, %135, %591 : vector<8x128xi1>, vector<8x128xf32>
    %593 = vector.shape_cast %592 : vector<8x128xf32> to vector<1x8x128xf32>
    %cst_146 = arith.constant dense<0xFF800000> : vector<1xf32>
    %594 = vector.multi_reduction <maximumf>, %593, %cst_146 [1, 2] : vector<1x8x128xf32> to vector<1xf32>
    %595 = vector.shape_cast %594 : vector<1xf32> to vector<1x1x1xf32>
    %596 = vector.extract %595[0, 0, 0] : f32 from vector<1x1x1xf32>
    %597 = vector.broadcast %596 : f32 to vector<1x1xf32>
    %598 = arith.subf %132, %581 : vector<1x1xf32>
    %599 = arith.mulf %598, %597 : vector<1x1xf32>
    %600 = arith.addf %588, %599 : vector<1x1xf32>
    %cst_147 = arith.constant 1.000000e+00 : f32
    %601 = vector.broadcast %cst_147 : f32 to vector<1x1xf32>
    %602 = arith.cmpf oge, %132, %601 : vector<1x1xf32>
    %cst_148 = arith.constant 0.000000e+00 : f32
    %603 = vector.broadcast %cst_148 : f32 to vector<1x1xf32>
    %604 = arith.select %602, %600, %603 : vector<1x1xi1>, vector<1x1xf32>
    %605 = arith.addf %117, %604 : vector<1x1xf32>
    %606 = tpu.iota {dimensions = array<i32: 0>} : vector<8x128xi32>
    %c0_i32_149 = arith.constant 0 : i32
    %607 = vector.broadcast %c0_i32_149 : i32 to vector<8x128xi32>
    %608 = arith.cmpi eq, %606, %607 : vector<8x128xi32>
    %cst_150 = arith.constant 0.000000e+00 : f32
    %609 = vector.shape_cast %107 : vector<1x1xf32> to vector<1x1xf32>
    %610 = vector.broadcast %609 : vector<1x1xf32> to vector<8x128xf32>
    %611 = vector.broadcast %cst_150 : f32 to vector<8x128xf32>
    %612 = arith.select %608, %610, %611 : vector<8x128xi1>, vector<8x128xf32>
    %c1_i32_151 = arith.constant 1 : i32
    %613 = vector.broadcast %c1_i32_151 : i32 to vector<8x128xi32>
    %614 = arith.cmpi eq, %606, %613 : vector<8x128xi32>
    %cst_152 = arith.constant 0.000000e+00 : f32
    %615 = vector.shape_cast %605 : vector<1x1xf32> to vector<1x1xf32>
    %616 = vector.broadcast %615 : vector<1x1xf32> to vector<8x128xf32>
    %617 = vector.broadcast %cst_152 : f32 to vector<8x128xf32>
    %618 = arith.select %614, %616, %617 : vector<8x128xi1>, vector<8x128xf32>
    %619 = arith.addf %612, %618 : vector<8x128xf32>
    %c2_i32_153 = arith.constant 2 : i32
    %620 = vector.broadcast %c2_i32_153 : i32 to vector<8x128xi32>
    %621 = arith.cmpi eq, %606, %620 : vector<8x128xi32>
    %cst_154 = arith.constant 0.000000e+00 : f32
    %622 = vector.shape_cast %112 : vector<1x1xf32> to vector<1x1xf32>
    %623 = vector.broadcast %622 : vector<1x1xf32> to vector<8x128xf32>
    %624 = vector.broadcast %cst_154 : f32 to vector<8x128xf32>
    %625 = arith.select %621, %623, %624 : vector<8x128xi1>, vector<8x128xf32>
    %626 = arith.addf %619, %625 : vector<8x128xf32>
    %c3_i32 = arith.constant 3 : i32
    %627 = vector.broadcast %c3_i32 : i32 to vector<8x128xi32>
    %628 = arith.cmpi eq, %606, %627 : vector<8x128xi32>
    %cst_155 = arith.constant 0.000000e+00 : f32
    %629 = vector.shape_cast %122 : vector<1x1xf32> to vector<1x1xf32>
    %630 = vector.broadcast %629 : vector<1x1xf32> to vector<8x128xf32>
    %631 = vector.broadcast %cst_155 : f32 to vector<8x128xf32>
    %632 = arith.select %628, %630, %631 : vector<8x128xi1>, vector<8x128xf32>
    %633 = arith.addf %626, %632 : vector<8x128xf32>
    %c4_i32_156 = arith.constant 4 : i32
    %634 = vector.broadcast %c4_i32_156 : i32 to vector<8x128xi32>
    %635 = arith.cmpi eq, %606, %634 : vector<8x128xi32>
    %cst_157 = arith.constant 0.000000e+00 : f32
    %636 = vector.shape_cast %127 : vector<1x1xf32> to vector<1x1xf32>
    %637 = vector.broadcast %636 : vector<1x1xf32> to vector<8x128xf32>
    %638 = vector.broadcast %cst_157 : f32 to vector<8x128xf32>
    %639 = arith.select %635, %637, %638 : vector<8x128xi1>, vector<8x128xf32>
    %640 = arith.addf %633, %639 : vector<8x128xf32>
    %c0_158 = arith.constant 0 : index
    %c0_159 = arith.constant 0 : index
    %c0_160 = arith.constant 0 : index
    %641 = vector.load %arg2[%c0_158, %c0_159, %c0_160] : memref<1x8x128xf32, #tpu.memory_space<vmem>>, vector<1x8x128xf32>
    %642 = vector.shape_cast %641 : vector<1x8x128xf32> to vector<8x128xf32>
    %643 = vector.shape_cast %640 : vector<8x128xf32> to vector<1x8x128xf32>
    tpu.vector_store %arg2[%c0_158, %c0_159, %c0_160], %643 {strides = array<i32>} : memref<1x8x128xf32, #tpu.memory_space<vmem>>, vector<1x8x128xf32>,
    return
  }
  func.func @transform_0(%arg0: i32) -> (i32, i32, i32, i32) {
    %c0_i32 = arith.constant 0 : i32
    %c0_i32_0 = arith.constant 0 : i32
    %c0_i32_1 = arith.constant 0 : i32
    %c0_i32_2 = arith.constant 0 : i32
    return %arg0, %c0_i32, %c0_i32_0, %c0_i32_1 : i32, i32, i32, i32
  }
  func.func @transform_1(%arg0: i32) -> (i32, i32, i32) {
    %c0_i32 = arith.constant 0 : i32
    %c0_i32_0 = arith.constant 0 : i32
    %c0_i32_1 = arith.constant 0 : i32
    return %arg0, %c0_i32, %c0_i32_0 : i32, i32, i32
  }
}

</mosaic_0001>

<llo_original>
// kernel: tpu_custom_call.1
$region0: #{tpu_custom_call.1}
  #allocation0 [shape = 'u32[]', space=smem, size = 0x4, offset = 0x4, fixed_abs, tag = 'smem constant byte address 0x4 - core index']
  #allocation1 [shape = 'u32[144,128]{1,0:T(1,128)}', space=vmem, size = 0x12000, scoped, tag = 'internal scratch']
  #allocation2 [shape = 'f32[8,128]{1,0:T(8,128)}', space=vmem, size = 0x1000, scoped, tag = 'scratch operand']
  %s0 = inlined_call_operand.hbm [shape: bf16[2,31,8,128], index: 0, kind: input, shape index: {}]
  %s1 = inlined_call_operand.hbm [shape: f32[2,8,128], index: 1, kind: output, shape index: {}]
  %s2 = sld [smem:[#allocation0]]
  $region41: #{tpu_custom_call.1} parent=0
    _
  %s4 = ssub.s32 1, %s2
  %s5 = scalar_select 0, %s4, %s2
  $region1: #{tpu_custom_call.1} parent=0
    #allocation3 [shape = 'u8[126976]{0}', space=vmem, size = 0x1f000, scoped, tag = 'input window, operand 0']
    #allocation4 [shape = 's32[2]{0}', space=sflag, size = 0x8, scoped, tag = 'scoped memory for tpu_custom_call.1']
    #allocation5 [shape = 's32[2]{0}', space=sflag, size = 0x8, scoped, tag = 'scoped memory for tpu_custom_call.1']
    #allocation6 [shape = 'u8[8192]{0}', space=vmem, size = 0x2000, scoped, tag = 'output window, operand 0']
    %6 = vsyncpa [#allocation4], 0
    %s7 = scalar_lea.sflag [#allocation4], 1
    %8 = vsyncpa %s7, 0
    %9 = vsyncpa [#allocation5], 0
    %s10 = scalar_lea.sflag [#allocation5], 1
    %11 = vsyncpa %s10, 0
    loop: start=0, step=1, limit=4
    $region2: #{tpu_custom_call.1} parent=1 // loop_pre_header
      _
    $region3: #{tpu_custom_call.1} parent=1 // loop_header
      %s13 = sphi 0, %s17
      %p14 = scmp.ge.s32.totalorder %s13, 4
      %s23 = sphi 0, %s25
      %s26 = sphi 0, %s23
      %s27 = sphi 0, %s26
      %s43 = sphi 0, %s27
      %s49 = sphi 0, %s51
      %s52 = sphi 0, %s49
      %s53 = sphi 0, %s52
      %s69 = sphi 0, %s53
    $region4: #{tpu_custom_call.1} parent=1 // loop_header_branch
      %16 = sbr.rel (%p14) target = $region8
    $region5: #{tpu_custom_call.1} parent=1 // loop_body
      %s18 = ssub.s32 %s13, 1
      %s19 = ssub.s32 %s13, 2
      %s20 = sadd.s32 %s13, 1
      %s21 = ssub.s32 %s13, %s20
      %p22 = scmp.eq.s32.totalorder %s21, 0
      %s24 = sadd.s32 %s23, 1
      %s25 = scalar_select %p22, %s23, %s24
      %p28 = pneg %p22
      %p29 = scmp.eq.s32.totalorder %s13, 1
      %p30 = por %p28, %p29
      %p31 = scmp.ne.s32.totalorder %s23, %s26
      %p32 = scmp.eq.s32.totalorder %s13, 0
      %p33 = por %p31, %p32
      %p34 = scmp.ne.s32.totalorder %s23, %s26
      %p35 = scmp.eq.s32.totalorder %s18, 1
      %p36 = por %p34, %p35
      %p37 = scmp.ne.s32.totalorder %s26, %s27
      %p38 = scmp.eq.s32.totalorder %s18, 0
      %p39 = por %p37, %p38
      %p40 = scmp.ne.s32.totalorder %s26, %s27
      %p41 = scmp.eq.s32.totalorder %s19, 1
      %p42 = por %p40, %p41
      %p44 = scmp.ne.s32.totalorder %s27, %s43
      %p45 = scmp.eq.s32.totalorder %s19, 0
      %p46 = por %p44, %p45
      %s47 = ssub.s32 %s13, %s20
      %p48 = scmp.eq.s32.totalorder %s47, 0
      %s50 = sadd.s32 %s49, 1
      %s51 = scalar_select %p48, %s49, %s50
      %p54 = pneg %p48
      %p55 = scmp.eq.s32.totalorder %s13, 1
      %p56 = por %p54, %p55
      %p57 = scmp.ne.s32.totalorder %s49, %s52
      %p58 = scmp.eq.s32.totalorder %s13, 0
      %p59 = por %p57, %p58
      %p60 = scmp.ne.s32.totalorder %s49, %s52
      %p61 = scmp.eq.s32.totalorder %s18, 1
      %p62 = por %p60, %p61
      %p63 = scmp.ne.s32.totalorder %s52, %s53
      %p64 = scmp.eq.s32.totalorder %s18, 0
      %p65 = por %p63, %p64
      %p66 = scmp.ne.s32.totalorder %s52, %s53
      %p67 = scmp.eq.s32.totalorder %s19, 1
      %p68 = por %p66, %p67
      %p70 = scmp.ne.s32.totalorder %s53, %s69
      %p71 = scmp.eq.s32.totalorder %s19, 0
      %p72 = por %p70, %p71
      %p73 = scmp.le.s32.totalorder 1, %s13
      %p74 = scmp.lt.s32.totalorder %s13, 3
      %p75 = pnand %p73, %p74
      %p76 = pneg %p75
      // Predicated region
      $region9: #{tpu_custom_call.1} parent=5 // pred_check
        _
      $region10: #{tpu_custom_call.1} parent=5 // pred_check_branch
        %78 = sbr.rel (%p75) target = $region12
      $region11: #{tpu_custom_call.1} parent=5 // pred_region
        %s79 = ssub.s32 %s13, 1
      $region12: #{tpu_custom_call.1} parent=5 // pred_fallthru
        _
      %p80 = scmp.lt.s32.totalorder %s13, 2
      // Predicated region
      $region13: #{tpu_custom_call.1} parent=5 // pred_check
        %p81 = pneg %p80
      $region14: #{tpu_custom_call.1} parent=5 // pred_check_branch
        %83 = sbr.rel (%p81) target = $region16
      $region15: #{tpu_custom_call.1} parent=5 // pred_region
        // Predicated region
        $region17: #{tpu_custom_call.1} parent=15 // pred_check
          %p84 = pneg %p33
        $region18: #{tpu_custom_call.1} parent=15 // pred_check_branch
          %86 = sbr.rel (%p84) target = $region20
        $region19: #{tpu_custom_call.1} parent=15 // pred_region
          %s87 = sand.u32 %s23, 1
          %s88 = scalar_lea.sflag [#allocation4], %s87
          %s89 = sand.u32 %s23, 1
          %s90 = smul.addr %s89, 124
          %s91 = scalar_lea.vmem [#allocation3], %s90
          %s93 = ssub.s32 1984, 1984
          %94 = vsyncadd %s88, %s93
          %s95 = smul.addr %s13, 31
          %s96 = smul.addr %s95, 64
          %s97 = scalar_lea.hbm %s0, %s96
          %s98 = sshll.u32 %s91, 4
          %s99 = int_to_ptr.vmem [resolvable:$true] %s98
          %104 = dma.hbm_to_vmem [thread:$0]  %s97, 1984, %s99, %s88, 64, 64, 4
        $region20: #{tpu_custom_call.1} parent=15 // pred_fallthru
          _
      $region16: #{tpu_custom_call.1} parent=5 // pred_fallthru
        _
      %p105 = scmp.le.s32.totalorder 1, %s13
      %p106 = scmp.lt.s32.totalorder %s13, 3
      %p107 = pnand %p105, %p106
      %p108 = pneg %p107
      // Predicated region
      $region21: #{tpu_custom_call.1} parent=5 // pred_check
        _
      $region22: #{tpu_custom_call.1} parent=5 // pred_check_branch
        %110 = sbr.rel (%p107) target = $region24
      $region23: #{tpu_custom_call.1} parent=5 // pred_region
        %s111 = ssub.s32 %s13, 1
        %s112 = sand.u32 %s26, 1
        %s113 = scalar_lea.sflag [#allocation4], %s112
        %s114 = sand.u32 %s26, 1
        %s115 = smul.addr %s114, 124
        %s116 = scalar_lea.vmem [#allocation3], %s115
        // Predicated region
        $region25: #{tpu_custom_call.1} parent=23 // pred_check
          %p117 = pneg %p39
        $region26: #{tpu_custom_call.1} parent=23 // pred_check_branch
          %119 = sbr.rel (%p117) target = $region28
        $region27: #{tpu_custom_call.1} parent=23 // pred_region
          %120 = dma.done %s113, 1984
        $region28: #{tpu_custom_call.1} parent=23 // pred_fallthru
          _
        %s121 = sand.u32 %s26, 1
        %s122 = scalar_lea.sflag [#allocation4], %s121
        %s123 = sand.u32 %s26, 1
        %s124 = smul.addr %s123, 124
        %s125 = scalar_lea.vmem [#allocation3], %s124
        %p126 = pneg %p39
        %p127 = pneg %p36
        %p128 = pneg %p65
        %p129 = pneg %p62
        %s130 = sand.u32 %s52, 1
        %s131 = scalar_lea.sflag [#allocation5], %s130
        %s132 = sand.u32 %s52, 1
        %s133 = smul.addr %s132, 8
        %s134 = scalar_lea.vmem [#allocation6], %s133
        %v135 = vlaneseq
        %v136 = vshrl.u32 %v135, 7
        %v137 = vlaneseq
        %v138 = vand.u32 %v137, 127
        %v139 = vmul.u32 %v136, 128
        %v140 = vadd.s32 %v139, %v138
        %s141 = sadd.s32 0, 30
        %s142 = smul.addr %s141, 4
        %s143 = scalar_lea.vmem %s116, %s142 [#allocation3]
        %v144 = vld [vmem:[%s143] sm:$0xf]
        %v145 = vunpack.c.l.bf16 %v144
        %vm146 = vcmp.ne.f32.partialorder %v145, 0.0
        %v147 = vsel %vm146, 1, 0
        %v148 = vcvt.s32.f32 %v147
        %vm149 = vcmp.gt.f32.partialorder %v145, 0.0
        %v150 = vsel %vm149, 1, 0
        %v151 = vcvt.s32.f32 %v150
        %v152 = vld [vmem:[%s116] sm:$0xf]
        %v153 = vld [vmem:[%s116 + $0x4] sm:$0xf]
        %v154 = vld [vmem:[%s116 + $0x8] sm:$0xf]
        %v155 = vld [vmem:[%s116 + $0xc] sm:$0xf]
        %v156 = vunpack.c.l.bf16 %v152
        %v157 = vunpack.c.l.bf16 %v153
        %v158 = vunpack.c.l.bf16 %v154
        %v159 = vunpack.c.l.bf16 %v155
        %s160 = sadd.s32 0, 4
        %s161 = smul.addr %s160, 4
        %s162 = scalar_lea.vmem %s116, %s161 [#allocation3]
        %v163 = vld [vmem:[%s162] sm:$0xf]
        %v164 = vld [vmem:[%s162 + $0x4] sm:$0xf]
        %v165 = vld [vmem:[%s162 + $0x8] sm:$0xf]
        %v166 = vld [vmem:[%s162 + $0xc] sm:$0xf]
        %v167 = vunpack.c.l.bf16 %v163
        %v168 = vunpack.c.l.bf16 %v164
        %v169 = vunpack.c.l.bf16 %v165
        %v170 = vunpack.c.l.bf16 %v166
        %v171 = vsub.f32 %v156, %v167
        %v172 = vsub.f32 %v157, %v168
        %v173 = vsub.f32 %v158, %v169
        %v174 = vsub.f32 %v159, %v170
        %v175 = vand.u32 2147483647, %v171
        %v176 = vand.u32 2147483647, %v172
        %v177 = vand.u32 2147483647, %v173
        %v178 = vand.u32 2147483647, %v174
        %vm179 = vcmp.lt.f32.partialorder %v175, 1.0
        %vm180 = vcmp.lt.f32.partialorder %v176, 1.0
        %vm181 = vcmp.lt.f32.partialorder %v177, 1.0
        %vm182 = vcmp.lt.f32.partialorder %v178, 1.0
        %v183 = vmul.f32 %v171, 0.5
        %v184 = vmul.f32 %v172, 0.5
        %v185 = vmul.f32 %v173, 0.5
        %v186 = vmul.f32 %v174, 0.5
        %v187 = vmul.f32 %v183, %v171
        %v188 = vmul.f32 %v184, %v172
        %v189 = vmul.f32 %v185, %v173
        %v190 = vmul.f32 %v186, %v174
        %v191 = vsub.f32 %v175, 0.5
        %v192 = vsub.f32 %v176, 0.5
        %v193 = vsub.f32 %v177, 0.5
        %v194 = vsub.f32 %v178, 0.5
        %v195 = vsel %vm179, %v187, %v191
        %v196 = vsel %vm180, %v188, %v192
        %v197 = vsel %vm181, %v189, %v193
        %v198 = vsel %vm182, %v190, %v194
        %v199 = vadd.f32 %v195, %v196
        %v200 = vadd.f32 %v199, %v197
        %v201 = vadd.f32 %v200, %v198
        %v202 = vmul.f32 %v201, %v148
        %v203 = vadd.f32 %v202, 0.0
        %s204 = sadd.s32 0, 8
        %s205 = smul.addr %s204, 4
        %s206 = scalar_lea.vmem %s116, %s205 [#allocation3]
        %v207 = vld [vmem:[%s206] sm:$0xf]
        %v208 = vld [vmem:[%s206 + $0x4] sm:$0xf]
        %v209 = vld [vmem:[%s206 + $0x8] sm:$0xf]
        %v210 = vld [vmem:[%s206 + $0xc] sm:$0xf]
        %v211 = vld [vmem:[%s206 + $0x10] sm:$0xf]
        %v212 = vld [vmem:[%s206 + $0x14] sm:$0xf]
        %v213 = vld [vmem:[%s206 + $0x18] sm:$0xf]
        %v214 = vld [vmem:[%s206 + $0x1c] sm:$0xf]
        %v215 = vld [vmem:[%s206 + $0x20] sm:$0xf]
        %v216 = vld [vmem:[%s206 + $0x24] sm:$0xf]
        %v217 = vunpack.c.l.bf16 %v207
        %v218 = vunpack.c.l.bf16 %v208
        %v219 = vunpack.c.l.bf16 %v209
        %v220 = vunpack.c.l.bf16 %v210
        %v221 = vunpack.c.l.bf16 %v211
        %v222 = vunpack.c.l.bf16 %v212
        %v223 = vunpack.c.l.bf16 %v213
        %v224 = vunpack.c.l.bf16 %v214
        %v225 = vunpack.c.l.bf16 %v215
        %v226 = vunpack.c.l.bf16 %v216
        %s227 = sadd.s32 0, 18
        %s228 = smul.addr %s227, 4
        %s229 = scalar_lea.vmem %s116, %s228 [#allocation3]
        %v230 = vld [vmem:[%s229] sm:$0xf]
        %v231 = vld [vmem:[%s229 + $0x4] sm:$0xf]
        %v232 = vld [vmem:[%s229 + $0x8] sm:$0xf]
        %v233 = vld [vmem:[%s229 + $0xc] sm:$0xf]
        %v234 = vld [vmem:[%s229 + $0x10] sm:$0xf]
        %v235 = vld [vmem:[%s229 + $0x14] sm:$0xf]
        %v236 = vld [vmem:[%s229 + $0x18] sm:$0xf]
        %v237 = vld [vmem:[%s229 + $0x1c] sm:$0xf]
        %v238 = vld [vmem:[%s229 + $0x20] sm:$0xf]
        %v239 = vld [vmem:[%s229 + $0x24] sm:$0xf]
        %v240 = vunpack.c.l.bf16 %v230
        %v241 = vunpack.c.l.bf16 %v231
        %v242 = vunpack.c.l.bf16 %v232
        %v243 = vunpack.c.l.bf16 %v233
        %v244 = vunpack.c.l.bf16 %v234
        %v245 = vunpack.c.l.bf16 %v235
        %v246 = vunpack.c.l.bf16 %v236
        %v247 = vunpack.c.l.bf16 %v237
        %v248 = vunpack.c.l.bf16 %v238
        %v249 = vunpack.c.l.bf16 %v239
        %v250 = vsub.f32 %v217, %v240
        %v251 = vsub.f32 %v218, %v241
        %v252 = vsub.f32 %v219, %v242
        %v253 = vsub.f32 %v220, %v243
        %v254 = vsub.f32 %v221, %v244
        %v255 = vsub.f32 %v222, %v245
        %v256 = vsub.f32 %v223, %v246
        %v257 = vsub.f32 %v224, %v247
        %v258 = vsub.f32 %v225, %v248
        %v259 = vsub.f32 %v226, %v249
        %v260 = vand.u32 2147483647, %v250
        %v261 = vand.u32 2147483647, %v251
        %v262 = vand.u32 2147483647, %v252
        %v263 = vand.u32 2147483647, %v253
        %v264 = vand.u32 2147483647, %v254
        %v265 = vand.u32 2147483647, %v255
        %v266 = vand.u32 2147483647, %v256
        %v267 = vand.u32 2147483647, %v257
        %v268 = vand.u32 2147483647, %v258
        %v269 = vand.u32 2147483647, %v259
        %vm270 = vcmp.lt.f32.partialorder %v260, 1.0
        %vm271 = vcmp.lt.f32.partialorder %v261, 1.0
        %vm272 = vcmp.lt.f32.partialorder %v262, 1.0
        %vm273 = vcmp.lt.f32.partialorder %v263, 1.0
        %vm274 = vcmp.lt.f32.partialorder %v264, 1.0
        %vm275 = vcmp.lt.f32.partialorder %v265, 1.0
        %vm276 = vcmp.lt.f32.partialorder %v266, 1.0
        %vm277 = vcmp.lt.f32.partialorder %v267, 1.0
        %vm278 = vcmp.lt.f32.partialorder %v268, 1.0
        %vm279 = vcmp.lt.f32.partialorder %v269, 1.0
        %v280 = vmul.f32 %v250, 0.5
        %v281 = vmul.f32 %v251, 0.5
        %v282 = vmul.f32 %v252, 0.5
        %v283 = vmul.f32 %v253, 0.5
        %v284 = vmul.f32 %v254, 0.5
        %v285 = vmul.f32 %v255, 0.5
        %v286 = vmul.f32 %v256, 0.5
        %v287 = vmul.f32 %v257, 0.5
        %v288 = vmul.f32 %v258, 0.5
        %v289 = vmul.f32 %v259, 0.5
        %v290 = vmul.f32 %v280, %v250
        %v291 = vmul.f32 %v281, %v251
        %v292 = vmul.f32 %v282, %v252
        %v293 = vmul.f32 %v283, %v253
        %v294 = vmul.f32 %v284, %v254
        %v295 = vmul.f32 %v285, %v255
        %v296 = vmul.f32 %v286, %v256
        %v297 = vmul.f32 %v287, %v257
        %v298 = vmul.f32 %v288, %v258
        %v299 = vmul.f32 %v289, %v259
        %v300 = vsub.f32 %v260, 0.5
        %v301 = vsub.f32 %v261, 0.5
        %v302 = vsub.f32 %v262, 0.5
        %v303 = vsub.f32 %v263, 0.5
        %v304 = vsub.f32 %v264, 0.5
        %v305 = vsub.f32 %v265, 0.5
        %v306 = vsub.f32 %v266, 0.5
        %v307 = vsub.f32 %v267, 0.5
        %v308 = vsub.f32 %v268, 0.5
        %v309 = vsub.f32 %v269, 0.5
        %v310 = vsel %vm270, %v290, %v300
        %v311 = vsel %vm271, %v291, %v301
        %v312 = vsel %vm272, %v292, %v302
        %v313 = vsel %vm273, %v293, %v303
        %v314 = vsel %vm274, %v294, %v304
        %v315 = vsel %vm275, %v295, %v305
        %v316 = vsel %vm276, %v296, %v306
        %v317 = vsel %vm277, %v297, %v307
        %v318 = vsel %vm278, %v298, %v308
        %v319 = vsel %vm279, %v299, %v309
        %v320 = vadd.f32 %v310, %v311
        %v321 = vadd.f32 %v320, %v312
        %v322 = vadd.f32 %v321, %v313
        %v323 = vadd.f32 %v322, %v314
        %v324 = vadd.f32 %v323, %v315
        %v325 = vadd.f32 %v324, %v316
        %v326 = vadd.f32 %v325, %v317
        %v327 = vadd.f32 %v326, %v318
        %v328 = vadd.f32 %v327, %v319
        %v329 = vmul.f32 %v328, %v151
        %v330 = vadd.f32 %v329, 0.0
        %s331 = sadd.s32 0, 28
        %s332 = smul.addr %s331, 4
        %s333 = scalar_lea.vmem %s116, %s332 [#allocation3]
        %v334 = vld [vmem:[%s333] sm:$0xf]
        %v335 = vunpack.c.l.bf16 %v334
        %s336 = sadd.s32 0, 29
        %s337 = smul.addr %s336, 4
        %s338 = scalar_lea.vmem %s116, %s337 [#allocation3]
        %v339 = vld [vmem:[%s338] sm:$0xf]
        %v340 = vunpack.c.l.bf16 %v339
        %v341 = vsub.f32 %v340, %v335
        %v342 = vmul.f32 %v148, 2.0
        %v343 = vsub.f32 1.0, %v342
        %v344 = vmul.f32 %v341, %v343
        %v345 = vmax.f32 %v344, 0.0
        %v346 = vand.u32 2147483647, %v344
        %v347 = vsub.f32 0.0, %v346
        %v348 = vmul.f32 %v347, 1.442695
        %v349 = vpow.pop %v348
        %v350 = vadd.f32 %v349, 1.0
        %v351 = vlog2.pop %v350
        %v352 = vmul.f32 %v351, 0.6931472
        %v353 = vadd.f32 %v345, %v352
        %v354 = vmul.f32 %v353, %v148
        %v355 = vadd.f32 %v354, 0.0
        %v356 = vadd.f32 %v148, 0.0
        %v357 = vadd.f32 %v151, 0.0
        %v358 = vsub.f32 1.0, %v148
        %vm359 = vcmp.lt.s32.totalorder %v140, 128
        %v360 = vsel %vm359, 1, 0
        %v361 = vcvt.s32.f32 %v360
        %v362 = vmul.f32 %v358, %v361
        %v363 = vmul.f32 %v353, %v362
        %364 = vst [vmem:[#allocation2] sm:$0xff] %v363
        %365 = vadd.xlane.f32.xlu0 %v203
        %v366 = vpop.xlane.xlu0 %365
        %v367 = vrot.slane %v366, 4
        %v368 = vadd.f32 %v366, %v367
        %v369 = vrot.slane %v368, 2
        %v370 = vadd.f32 %v368, %v369
        %v371 = vrot.slane %v370, 1
        %v372 = vadd.f32 %v370, %v371
        %s373 = vtos %v372
        %374 = vadd.xlane.f32.xlu0 %v330
        %v375 = vpop.xlane.xlu0 %374
        %v376 = vrot.slane %v375, 4
        %v377 = vadd.f32 %v375, %v376
        %v378 = vrot.slane %v377, 2
        %v379 = vadd.f32 %v377, %v378
        %v380 = vrot.slane %v379, 1
        %v381 = vadd.f32 %v379, %v380
        %s382 = vtos %v381
        %383 = vadd.xlane.f32.xlu0 %v355
        %v384 = vpop.xlane.xlu0 %383
        %v385 = vrot.slane %v384, 4
        %v386 = vadd.f32 %v384, %v385
        %v387 = vrot.slane %v386, 2
        %v388 = vadd.f32 %v386, %v387
        %v389 = vrot.slane %v388, 1
        %v390 = vadd.f32 %v388, %v389
        %s391 = vtos %v390
        %v392 = vstv %s391
        %393 = vadd.xlane.f32.xlu0 %v356
        %v394 = vpop.xlane.xlu0 %393
        %v395 = vrot.slane %v394, 4
        %v396 = vadd.f32 %v394, %v395
        %v397 = vrot.slane %v396, 2
        %v398 = vadd.f32 %v396, %v397
        %v399 = vrot.slane %v398, 1
        %v400 = vadd.f32 %v398, %v399
        %s401 = vtos %v400
        %v402 = vstv %s401
        %403 = vadd.xlane.f32.xlu0 %v357
        %v404 = vpop.xlane.xlu0 %403
        %v405 = vrot.slane %v404, 4
        %v406 = vadd.f32 %v404, %v405
        %v407 = vrot.slane %v406, 2
        %v408 = vadd.f32 %v406, %v407
        %v409 = vrot.slane %v408, 1
        %v410 = vadd.f32 %v408, %v409
        %s411 = vtos %v410
        %v412 = vmul.f32 %v402, 7.0
        %v413 = vmin.f32 %v412, 127.0
        %v414 = vfloor.f32 %v413
        %v415 = vmax.f32 %v414, 1.0
        %v416 = vld [vmem:[#allocation2] sm:$0xff]
        %vm418 = vcmp.ge.s32.totalorder %v416, 1073741824
        %v419 = vsel %vm418, 1.0, 0.0
        %420 = vadd.xlane.f32.xlu0 %v419
        %v421 = vpop.xlane.xlu0 %420
        %v422 = vrot.slane %v421, 4
        %v423 = vadd.f32 %v421, %v422
        %v424 = vrot.slane %v423, 2
        %v425 = vadd.f32 %v423, %v424
        %v426 = vrot.slane %v425, 1
        %v427 = vadd.f32 %v425, %v426
        %s428 = vtos %v427
        %v429 = vstv %s428
        %vm430 = vcmp.ge.f32.partialorder %v429, %v415
        %v431 = vsel %vm430, 1073741824, 0
        %v432 = vor.u32 %v431, 536870912
        %vm433 = vcmp.ge.s32.totalorder %v416, %v432
        %v434 = vsel %vm433, 1.0, 0.0
        %435 = vadd.xlane.f32.xlu0 %v434
        %v436 = vpop.xlane.xlu0 %435
        %v437 = vrot.slane %v436, 4
        %v438 = vadd.f32 %v436, %v437
        %v439 = vrot.slane %v438, 2
        %v440 = vadd.f32 %v438, %v439
        %v441 = vrot.slane %v440, 1
        %v442 = vadd.f32 %v440, %v441
        %s443 = vtos %v442
        %v444 = vstv %s443
        %vm445 = vcmp.ge.f32.partialorder %v444, %v415
        %v446 = vsel %vm445, %v432, %v431
        %v447 = vor.u32 %v446, 268435456
        %vm448 = vcmp.ge.s32.totalorder %v416, %v447
        %v449 = vsel %vm448, 1.0, 0.0
        %450 = vadd.xlane.f32.xlu0 %v449
        %v451 = vpop.xlane.xlu0 %450
        %v452 = vrot.slane %v451, 4
        %v453 = vadd.f32 %v451, %v452
        %v454 = vrot.slane %v453, 2
        %v455 = vadd.f32 %v453, %v454
        %v456 = vrot.slane %v455, 1
        %v457 = vadd.f32 %v455, %v456
        %s458 = vtos %v457
        %v459 = vstv %s458
        %vm460 = vcmp.ge.f32.partialorder %v459, %v415
        %v461 = vsel %vm460, %v447, %v446
        %v462 = vor.u32 %v461, 134217728
        %vm463 = vcmp.ge.s32.totalorder %v416, %v462
        %v464 = vsel %vm463, 1.0, 0.0
        %465 = vadd.xlane.f32.xlu0 %v464
        %v466 = vpop.xlane.xlu0 %465
        %v467 = vrot.slane %v466, 4
        %v468 = vadd.f32 %v466, %v467
        %v469 = vrot.slane %v468, 2
        %v470 = vadd.f32 %v468, %v469
        %v471 = vrot.slane %v470, 1
        %v472 = vadd.f32 %v470, %v471
        %s473 = vtos %v472
        %v474 = vstv %s473
        %vm475 = vcmp.ge.f32.partialorder %v474, %v415
        %v476 = vsel %vm475, %v462, %v461
        %v477 = vor.u32 %v476, 67108864
        %vm478 = vcmp.ge.s32.totalorder %v416, %v477
        %v479 = vsel %vm478, 1.0, 0.0
        %480 = vadd.xlane.f32.xlu0 %v479
        %v481 = vpop.xlane.xlu0 %480
        %v482 = vrot.slane %v481, 4
        %v483 = vadd.f32 %v481, %v482
        %v484 = vrot.slane %v483, 2
        %v485 = vadd.f32 %v483, %v484
        %v486 = vrot.slane %v485, 1
        %v487 = vadd.f32 %v485, %v486
        %s488 = vtos %v487
        %v489 = vstv %s488
        %vm490 = vcmp.ge.f32.partialorder %v489, %v415
        %v491 = vsel %vm490, %v477, %v476
        %v492 = vor.u32 %v491, 33554432
        %vm493 = vcmp.ge.s32.totalorder %v416, %v492
        %v494 = vsel %vm493, 1.0, 0.0
        %495 = vadd.xlane.f32.xlu0 %v494
        %v496 = vpop.xlane.xlu0 %495
        %v497 = vrot.slane %v496, 4
        %v498 = vadd.f32 %v496, %v497
        %v499 = vrot.slane %v498, 2
        %v500 = vadd.f32 %v498, %v499
        %v501 = vrot.slane %v500, 1
        %v502 = vadd.f32 %v500, %v501
        %s503 = vtos %v502
        %v504 = vstv %s503
        %vm505 = vcmp.ge.f32.partialorder %v504, %v415
        %v506 = vsel %vm505, %v492, %v491
        %v507 = vor.u32 %v506, 16777216
        %vm508 = vcmp.ge.s32.totalorder %v416, %v507
        %v509 = vsel %vm508, 1.0, 0.0
        %510 = vadd.xlane.f32.xlu0 %v509
        %v511 = vpop.xlane.xlu0 %510
        %v512 = vrot.slane %v511, 4
        %v513 = vadd.f32 %v511, %v512
        %v514 = vrot.slane %v513, 2
        %v515 = vadd.f32 %v513, %v514
        %v516 = vrot.slane %v515, 1
        %v517 = vadd.f32 %v515, %v516
        %s518 = vtos %v517
        %v519 = vstv %s518
        %vm520 = vcmp.ge.f32.partialorder %v519, %v415
        %v521 = vsel %vm520, %v507, %v506
        %v522 = vor.u32 %v521, 8388608
        %vm523 = vcmp.ge.s32.totalorder %v416, %v522
        %v524 = vsel %vm523, 1.0, 0.0
        %525 = vadd.xlane.f32.xlu0 %v524
        %v526 = vpop.xlane.xlu0 %525
        %v527 = vrot.slane %v526, 4
        %v528 = vadd.f32 %v526, %v527
        %v529 = vrot.slane %v528, 2
        %v530 = vadd.f32 %v528, %v529
        %v531 = vrot.slane %v530, 1
        %v532 = vadd.f32 %v530, %v531
        %s533 = vtos %v532
        %v534 = vstv %s533
        %vm535 = vcmp.ge.f32.partialorder %v534, %v415
        %v536 = vsel %vm535, %v522, %v521
        %v537 = vor.u32 %v536, 4194304
        %vm538 = vcmp.ge.s32.totalorder %v416, %v537
        %v539 = vsel %vm538, 1.0, 0.0
        %540 = vadd.xlane.f32.xlu0 %v539
        %v541 = vpop.xlane.xlu0 %540
        %v542 = vrot.slane %v541, 4
        %v543 = vadd.f32 %v541, %v542
        %v544 = vrot.slane %v543, 2
        %v545 = vadd.f32 %v543, %v544
        %v546 = vrot.slane %v545, 1
        %v547 = vadd.f32 %v545, %v546
        %s548 = vtos %v547
        %v549 = vstv %s548
        %vm550 = vcmp.ge.f32.partialorder %v549, %v415
        %v551 = vsel %vm550, %v537, %v536
        %v552 = vor.u32 %v551, 2097152
        %vm553 = vcmp.ge.s32.totalorder %v416, %v552
        %v554 = vsel %vm553, 1.0, 0.0
        %555 = vadd.xlane.f32.xlu0 %v554
        %v556 = vpop.xlane.xlu0 %555
        %v557 = vrot.slane %v556, 4
        %v558 = vadd.f32 %v556, %v557
        %v559 = vrot.slane %v558, 2
        %v560 = vadd.f32 %v558, %v559
        %v561 = vrot.slane %v560, 1
        %v562 = vadd.f32 %v560, %v561
        %s563 = vtos %v562
        %v564 = vstv %s563
        %vm565 = vcmp.ge.f32.partialorder %v564, %v415
        %v566 = vsel %vm565, %v552, %v551
        %v567 = vor.u32 %v566, 1048576
        %vm568 = vcmp.ge.s32.totalorder %v416, %v567
        %v569 = vsel %vm568, 1.0, 0.0
        %570 = vadd.xlane.f32.xlu0 %v569
        %v571 = vpop.xlane.xlu0 %570
        %v572 = vrot.slane %v571, 4
        %v573 = vadd.f32 %v571, %v572
        %v574 = vrot.slane %v573, 2
        %v575 = vadd.f32 %v573, %v574
        %v576 = vrot.slane %v575, 1
        %v577 = vadd.f32 %v575, %v576
        %s578 = vtos %v577
        %v579 = vstv %s578
        %vm580 = vcmp.ge.f32.partialorder %v579, %v415
        %v581 = vsel %vm580, %v567, %v566
        %v582 = vor.u32 %v581, 524288
        %vm583 = vcmp.ge.s32.totalorder %v416, %v582
        %v584 = vsel %vm583, 1.0, 0.0
        %585 = vadd.xlane.f32.xlu0 %v584
        %v586 = vpop.xlane.xlu0 %585
        %v587 = vrot.slane %v586, 4
        %v588 = vadd.f32 %v586, %v587
        %v589 = vrot.slane %v588, 2
        %v590 = vadd.f32 %v588, %v589
        %v591 = vrot.slane %v590, 1
        %v592 = vadd.f32 %v590, %v591
        %s593 = vtos %v592
        %v594 = vstv %s593
        %vm595 = vcmp.ge.f32.partialorder %v594, %v415
        %v596 = vsel %vm595, %v582, %v581
        %v597 = vor.u32 %v596, 262144
        %vm598 = vcmp.ge.s32.totalorder %v416, %v597
        %v599 = vsel %vm598, 1.0, 0.0
        %600 = vadd.xlane.f32.xlu0 %v599
        %v601 = vpop.xlane.xlu0 %600
        %v602 = vrot.slane %v601, 4
        %v603 = vadd.f32 %v601, %v602
        %v604 = vrot.slane %v603, 2
        %v605 = vadd.f32 %v603, %v604
        %v606 = vrot.slane %v605, 1
        %v607 = vadd.f32 %v605, %v606
        %s608 = vtos %v607
        %v609 = vstv %s608
        %vm610 = vcmp.ge.f32.partialorder %v609, %v415
        %v611 = vsel %vm610, %v597, %v596
        %v612 = vor.u32 %v611, 131072
        %vm613 = vcmp.ge.s32.totalorder %v416, %v612
        %v614 = vsel %vm613, 1.0, 0.0
        %615 = vadd.xlane.f32.xlu0 %v614
        %v616 = vpop.xlane.xlu0 %615
        %v617 = vrot.slane %v616, 4
        %v618 = vadd.f32 %v616, %v617
        %v619 = vrot.slane %v618, 2
        %v620 = vadd.f32 %v618, %v619
        %v621 = vrot.slane %v620, 1
        %v622 = vadd.f32 %v620, %v621
        %s623 = vtos %v622
        %v624 = vstv %s623
        %vm625 = vcmp.ge.f32.partialorder %v624, %v415
        %v626 = vsel %vm625, %v612, %v611
        %v627 = vor.u32 %v626, 65536
        %vm628 = vcmp.ge.s32.totalorder %v416, %v627
        %v629 = vsel %vm628, 1.0, 0.0
        %630 = vadd.xlane.f32.xlu0 %v629
        %v631 = vpop.xlane.xlu0 %630
        %v632 = vrot.slane %v631, 4
        %v633 = vadd.f32 %v631, %v632
        %v634 = vrot.slane %v633, 2
        %v635 = vadd.f32 %v633, %v634
        %v636 = vrot.slane %v635, 1
        %v637 = vadd.f32 %v635, %v636
        %s638 = vtos %v637
        %v639 = vstv %s638
        %vm640 = vcmp.ge.f32.partialorder %v639, %v415
        %v641 = vsel %vm640, %v627, %v626
        %v642 = vor.u32 %v641, 32768
        %vm643 = vcmp.ge.s32.totalorder %v416, %v642
        %v644 = vsel %vm643, 1.0, 0.0
        %645 = vadd.xlane.f32.xlu0 %v644
        %v646 = vpop.xlane.xlu0 %645
        %v647 = vrot.slane %v646, 4
        %v648 = vadd.f32 %v646, %v647
        %v649 = vrot.slane %v648, 2
        %v650 = vadd.f32 %v648, %v649
        %v651 = vrot.slane %v650, 1
        %v652 = vadd.f32 %v650, %v651
        %s653 = vtos %v652
        %v654 = vstv %s653
        %vm655 = vcmp.ge.f32.partialorder %v654, %v415
        %v656 = vsel %vm655, %v642, %v641
        %v657 = vor.u32 %v656, 16384
        %vm658 = vcmp.ge.s32.totalorder %v416, %v657
        %v659 = vsel %vm658, 1.0, 0.0
        %660 = vadd.xlane.f32.xlu0 %v659
        %v661 = vpop.xlane.xlu0 %660
        %v662 = vrot.slane %v661, 4
        %v663 = vadd.f32 %v661, %v662
        %v664 = vrot.slane %v663, 2
        %v665 = vadd.f32 %v663, %v664
        %v666 = vrot.slane %v665, 1
        %v667 = vadd.f32 %v665, %v666
        %s668 = vtos %v667
        %v669 = vstv %s668
        %vm670 = vcmp.ge.f32.partialorder %v669, %v415
        %v671 = vsel %vm670, %v657, %v656
        %v672 = vor.u32 %v671, 8192
        %vm673 = vcmp.ge.s32.totalorder %v416, %v672
        %v674 = vsel %vm673, 1.0, 0.0
        %675 = vadd.xlane.f32.xlu0 %v674
        %v676 = vpop.xlane.xlu0 %675
        %v677 = vrot.slane %v676, 4
        %v678 = vadd.f32 %v676, %v677
        %v679 = vrot.slane %v678, 2
        %v680 = vadd.f32 %v678, %v679
        %v681 = vrot.slane %v680, 1
        %v682 = vadd.f32 %v680, %v681
        %s683 = vtos %v682
        %v684 = vstv %s683
        %vm685 = vcmp.ge.f32.partialorder %v684, %v415
        %v686 = vsel %vm685, %v672, %v671
        %v687 = vor.u32 %v686, 4096
        %vm688 = vcmp.ge.s32.totalorder %v416, %v687
        %v689 = vsel %vm688, 1.0, 0.0
        %690 = vadd.xlane.f32.xlu0 %v689
        %v691 = vpop.xlane.xlu0 %690
        %v692 = vrot.slane %v691, 4
        %v693 = vadd.f32 %v691, %v692
        %v694 = vrot.slane %v693, 2
        %v695 = vadd.f32 %v693, %v694
        %v696 = vrot.slane %v695, 1
        %v697 = vadd.f32 %v695, %v696
        %s698 = vtos %v697
        %v699 = vstv %s698
        %vm700 = vcmp.ge.f32.partialorder %v699, %v415
        %v701 = vsel %vm700, %v687, %v686
        %v702 = vor.u32 %v701, 2048
        %vm703 = vcmp.ge.s32.totalorder %v416, %v702
        %v704 = vsel %vm703, 1.0, 0.0
        %705 = vadd.xlane.f32.xlu0 %v704
        %v706 = vpop.xlane.xlu0 %705
        %v707 = vrot.slane %v706, 4
        %v708 = vadd.f32 %v706, %v707
        %v709 = vrot.slane %v708, 2
        %v710 = vadd.f32 %v708, %v709
        %v711 = vrot.slane %v710, 1
        %v712 = vadd.f32 %v710, %v711
        %s713 = vtos %v712
        %v714 = vstv %s713
        %vm715 = vcmp.ge.f32.partialorder %v714, %v415
        %v716 = vsel %vm715, %v702, %v701
        %v717 = vor.u32 %v716, 1024
        %vm718 = vcmp.ge.s32.totalorder %v416, %v717
        %v719 = vsel %vm718, 1.0, 0.0
        %720 = vadd.xlane.f32.xlu0 %v719
        %v721 = vpop.xlane.xlu0 %720
        %v722 = vrot.slane %v721, 4
        %v723 = vadd.f32 %v721, %v722
        %v724 = vrot.slane %v723, 2
        %v725 = vadd.f32 %v723, %v724
        %v726 = vrot.slane %v725, 1
        %v727 = vadd.f32 %v725, %v726
        %s728 = vtos %v727
        %v729 = vstv %s728
        %vm730 = vcmp.ge.f32.partialorder %v729, %v415
        %v731 = vsel %vm730, %v717, %v716
        %v732 = vor.u32 %v731, 512
        %vm733 = vcmp.ge.s32.totalorder %v416, %v732
        %v734 = vsel %vm733, 1.0, 0.0
        %735 = vadd.xlane.f32.xlu0 %v734
        %v736 = vpop.xlane.xlu0 %735
        %v737 = vrot.slane %v736, 4
        %v738 = vadd.f32 %v736, %v737
        %v739 = vrot.slane %v738, 2
        %v740 = vadd.f32 %v738, %v739
        %v741 = vrot.slane %v740, 1
        %v742 = vadd.f32 %v740, %v741
        %s743 = vtos %v742
        %v744 = vstv %s743
        %vm745 = vcmp.ge.f32.partialorder %v744, %v415
        %v746 = vsel %vm745, %v732, %v731
        %v747 = vor.u32 %v746, 256
        %vm748 = vcmp.ge.s32.totalorder %v416, %v747
        %v749 = vsel %vm748, 1.0, 0.0
        %750 = vadd.xlane.f32.xlu0 %v749
        %v751 = vpop.xlane.xlu0 %750
        %v752 = vrot.slane %v751, 4
        %v753 = vadd.f32 %v751, %v752
        %v754 = vrot.slane %v753, 2
        %v755 = vadd.f32 %v753, %v754
        %v756 = vrot.slane %v755, 1
        %v757 = vadd.f32 %v755, %v756
        %s758 = vtos %v757
        %v759 = vstv %s758
        %vm760 = vcmp.ge.f32.partialorder %v759, %v415
        %v761 = vsel %vm760, %v747, %v746
        %v762 = vor.u32 %v761, 128
        %vm763 = vcmp.ge.s32.totalorder %v416, %v762
        %v764 = vsel %vm763, 1.0, 0.0
        %765 = vadd.xlane.f32.xlu0 %v764
        %v766 = vpop.xlane.xlu0 %765
        %v767 = vrot.slane %v766, 4
        %v768 = vadd.f32 %v766, %v767
        %v769 = vrot.slane %v768, 2
        %v770 = vadd.f32 %v768, %v769
        %v771 = vrot.slane %v770, 1
        %v772 = vadd.f32 %v770, %v771
        %s773 = vtos %v772
        %v774 = vstv %s773
        %vm775 = vcmp.ge.f32.partialorder %v774, %v415
        %v776 = vsel %vm775, %v762, %v761
        %v777 = vor.u32 %v776, 64
        %vm778 = vcmp.ge.s32.totalorder %v416, %v777
        %v779 = vsel %vm778, 1.0, 0.0
        %780 = vadd.xlane.f32.xlu0 %v779
        %v781 = vpop.xlane.xlu0 %780
        %v782 = vrot.slane %v781, 4
        %v783 = vadd.f32 %v781, %v782
        %v784 = vrot.slane %v783, 2
        %v785 = vadd.f32 %v783, %v784
        %v786 = vrot.slane %v785, 1
        %v787 = vadd.f32 %v785, %v786
        %s788 = vtos %v787
        %v789 = vstv %s788
        %vm790 = vcmp.ge.f32.partialorder %v789, %v415
        %v791 = vsel %vm790, %v777, %v776
        %v792 = vor.u32 %v791, 32
        %vm793 = vcmp.ge.s32.totalorder %v416, %v792
        %v794 = vsel %vm793, 1.0, 0.0
        %795 = vadd.xlane.f32.xlu0 %v794
        %v796 = vpop.xlane.xlu0 %795
        %v797 = vrot.slane %v796, 4
        %v798 = vadd.f32 %v796, %v797
        %v799 = vrot.slane %v798, 2
        %v800 = vadd.f32 %v798, %v799
        %v801 = vrot.slane %v800, 1
        %v802 = vadd.f32 %v800, %v801
        %s803 = vtos %v802
        %v804 = vstv %s803
        %vm805 = vcmp.ge.f32.partialorder %v804, %v415
        %v806 = vsel %vm805, %v792, %v791
        %v807 = vor.u32 %v806, 16
        %vm808 = vcmp.ge.s32.totalorder %v416, %v807
        %v809 = vsel %vm808, 1.0, 0.0
        %810 = vadd.xlane.f32.xlu0 %v809
        %v811 = vpop.xlane.xlu0 %810
        %v812 = vrot.slane %v811, 4
        %v813 = vadd.f32 %v811, %v812
        %v814 = vrot.slane %v813, 2
        %v815 = vadd.f32 %v813, %v814
        %v816 = vrot.slane %v815, 1
        %v817 = vadd.f32 %v815, %v816
        %s818 = vtos %v817
        %v819 = vstv %s818
        %vm820 = vcmp.ge.f32.partialorder %v819, %v415
        %v821 = vsel %vm820, %v807, %v806
        %v822 = vor.u32 %v821, 8
        %vm823 = vcmp.ge.s32.totalorder %v416, %v822
        %v824 = vsel %vm823, 1.0, 0.0
        %825 = vadd.xlane.f32.xlu0 %v824
        %v826 = vpop.xlane.xlu0 %825
        %v827 = vrot.slane %v826, 4
        %v828 = vadd.f32 %v826, %v827
        %v829 = vrot.slane %v828, 2
        %v830 = vadd.f32 %v828, %v829
        %v831 = vrot.slane %v830, 1
        %v832 = vadd.f32 %v830, %v831
        %s833 = vtos %v832
        %v834 = vstv %s833
        %vm835 = vcmp.ge.f32.partialorder %v834, %v415
        %v836 = vsel %vm835, %v822, %v821
        %v837 = vor.u32 %v836, 4
        %vm838 = vcmp.ge.s32.totalorder %v416, %v837
        %v839 = vsel %vm838, 1.0, 0.0
        %840 = vadd.xlane.f32.xlu0 %v839
        %v841 = vpop.xlane.xlu0 %840
        %v842 = vrot.slane %v841, 4
        %v843 = vadd.f32 %v841, %v842
        %v844 = vrot.slane %v843, 2
        %v845 = vadd.f32 %v843, %v844
        %v846 = vrot.slane %v845, 1
        %v847 = vadd.f32 %v845, %v846
        %s848 = vtos %v847
        %v849 = vstv %s848
        %vm850 = vcmp.ge.f32.partialorder %v849, %v415
        %v851 = vsel %vm850, %v837, %v836
        %v852 = vor.u32 %v851, 2
        %vm853 = vcmp.ge.s32.totalorder %v416, %v852
        %v854 = vsel %vm853, 1.0, 0.0
        %855 = vadd.xlane.f32.xlu0 %v854
        %v856 = vpop.xlane.xlu0 %855
        %v857 = vrot.slane %v856, 4
        %v858 = vadd.f32 %v856, %v857
        %v859 = vrot.slane %v858, 2
        %v860 = vadd.f32 %v858, %v859
        %v861 = vrot.slane %v860, 1
        %v862 = vadd.f32 %v860, %v861
        %s863 = vtos %v862
        %v864 = vstv %s863
        %vm865 = vcmp.ge.f32.partialorder %v864, %v415
        %v866 = vsel %vm865, %v852, %v851
        %v867 = vor.u32 %v866, 1
        %vm868 = vcmp.ge.s32.totalorder %v416, %v867
        %v869 = vsel %vm868, 1.0, 0.0
        %870 = vadd.xlane.f32.xlu0 %v869
        %v871 = vpop.xlane.xlu0 %870
        %v872 = vrot.slane %v871, 4
        %v873 = vadd.f32 %v871, %v872
        %v874 = vrot.slane %v873, 2
        %v875 = vadd.f32 %v873, %v874
        %v876 = vrot.slane %v875, 1
        %v877 = vadd.f32 %v875, %v876
        %s878 = vtos %v877
        %v879 = vstv %s878
        %vm880 = vcmp.ge.f32.partialorder %v879, %v415
        %v881 = vsel %vm880, %v867, %v866
        %vm882 = vcmp.gt.s32.totalorder %v416, %v881
        %v883 = vsel %vm882, 1.0, 0.0
        %884 = vadd.xlane.f32.xlu0 %v883
        %v885 = vpop.xlane.xlu0 %884
        %v886 = vrot.slane %v885, 4
        %v887 = vadd.f32 %v885, %v886
        %v888 = vrot.slane %v887, 2
        %v889 = vadd.f32 %v887, %v888
        %v890 = vrot.slane %v889, 1
        %v891 = vadd.f32 %v889, %v890
        %s892 = vtos %v891
        %v893 = vstv %s892
        %v894 = vsel %vm882, %v416, 0.0
        %895 = vadd.xlane.f32.xlu0 %v894
        %v896 = vpop.xlane.xlu0 %895
        %v897 = vrot.slane %v896, 4
        %v898 = vadd.f32 %v896, %v897
        %v899 = vrot.slane %v898, 2
        %v900 = vadd.f32 %v898, %v899
        %v901 = vrot.slane %v900, 1
        %v902 = vadd.f32 %v900, %v901
        %s903 = vtos %v902
        %v904 = vstv %s903
        %vm905 = vcmp.eq.s32.totalorder %v416, %v881
        %v906 = vsel %vm905, %v416, 0.0
        %907 = vmax.xlane.f32.xlu0 %v906
        %v908 = vpop.xlane.xlu0 %907
        %v909 = vrot.slane %v908, 4
        %v910 = vmax.f32 %v908, %v909
        %v911 = vrot.slane %v910, 2
        %v912 = vmax.f32 %v910, %v911
        %v913 = vrot.slane %v912, 1
        %v914 = vmax.f32 %v912, %v913
        %s915 = vtos %v914
        %v916 = vstv %s915
        %v917 = vsub.f32 %v414, %v893
        %v918 = vmul.f32 %v917, %v916
        %v919 = vadd.f32 %v904, %v918
        %vm920 = vcmp.ge.f32.partialorder %v414, 1.0
        %v921 = vsel %vm920, %v919, 0.0
        %v922 = vadd.f32 %v392, %v921
        %vm923 = vcmp.eq.s32.totalorder %v136, 0
        %v924 = vstv %s373
        %v925 = vsel %vm923, %v924, 0.0
        %vm926 = vcmp.eq.s32.totalorder %v136, 1
        %v927 = vsel %vm926, %v922, 0.0
        %v928 = vadd.f32 %v925, %v927
        %vm929 = vcmp.eq.s32.totalorder %v136, 2
        %v930 = vstv %s382
        %v931 = vsel %vm929, %v930, 0.0
        %v932 = vadd.f32 %v928, %v931
        %vm933 = vcmp.eq.s32.totalorder %v136, 3
        %v934 = vsel %vm933, %v402, 0.0
        %v935 = vadd.f32 %v932, %v934
        %vm936 = vcmp.eq.s32.totalorder %v136, 4
        %v937 = vstv %s411
        %v938 = vsel %vm936, %v937, 0.0
        %v939 = vadd.f32 %v935, %v938
        %940 = vst [vmem:[%s134] sm:$0xff] %v939
        %s941 = sand.u32 %s52, 1
        %s942 = scalar_lea.sflag [#allocation5], %s941
        %s943 = sand.u32 %s52, 1
        %s944 = smul.addr %s943, 8
        %s945 = scalar_lea.vmem [#allocation6], %s944
        // Predicated region
        $region29: #{tpu_custom_call.1} parent=23 // pred_check
          %p946 = pneg %p62
        $region30: #{tpu_custom_call.1} parent=23 // pred_check_branch
          %948 = sbr.rel (%p946) target = $region32
        $region31: #{tpu_custom_call.1} parent=23 // pred_region
          %s950 = ssub.s32 128, 128
          %951 = vsyncadd %s942, %s950
          %s952 = smul.addr %s18, 128
          %s953 = scalar_lea.hbm %s1, %s952
          %s955 = sshll.u32 %s945, 4
          %s956 = int_to_ptr.vmem [resolvable:$true] %s955
          %958 = dma.vmem_to_hbm [thread:$0]  %s956, 128, %s953, %s942
        $region32: #{tpu_custom_call.1} parent=23 // pred_fallthru
          _
      $region24: #{tpu_custom_call.1} parent=5 // pred_fallthru
        _
      %p959 = scmp.le.s32.totalorder 2, %s13
      // Predicated region
      $region33: #{tpu_custom_call.1} parent=5 // pred_check
        %p960 = pneg %p959
      $region34: #{tpu_custom_call.1} parent=5 // pred_check_branch
        %962 = sbr.rel (%p960) target = $region36
      $region35: #{tpu_custom_call.1} parent=5 // pred_region
        %s963 = ssub.s32 %s13, 2
        // Predicated region
        $region37: #{tpu_custom_call.1} parent=35 // pred_check
          %p964 = pneg %p68
        $region38: #{tpu_custom_call.1} parent=35 // pred_check_branch
          %966 = sbr.rel (%p964) target = $region40
        $region39: #{tpu_custom_call.1} parent=35 // pred_region
          %s967 = sand.u32 %s53, 1
          %s968 = scalar_lea.sflag [#allocation5], %s967
          %s969 = sand.u32 %s53, 1
          %s970 = smul.addr %s969, 8
          %s971 = scalar_lea.vmem [#allocation6], %s970
          %972 = dma.done %s968, 128
        $region40: #{tpu_custom_call.1} parent=35 // pred_fallthru
          _
      $region36: #{tpu_custom_call.1} parent=5 // pred_fallthru
        _
    $region6: #{tpu_custom_call.1} parent=1 // loop_footer
      %s17 = sadd.s32 1, %s13
    $region7: #{tpu_custom_call.1} parent=1 // loop_footer_branch
      %12 = sbr.rel target = $region3
    $region8: #{tpu_custom_call.1} parent=1 // loop_exit
      _
    %973 = vsyncpa [#allocation4], 1
    %s974 = scalar_lea.sflag [#allocation4], 1
    %975 = vsyncpa %s974, 1
    %976 = vsyncpa [#allocation5], 1
    %s977 = scalar_lea.sflag [#allocation5], 1
    %978 = vsyncpa %s977, 1

</llo_original>
